<compile_context>
chip_gen: v5e
topology: v5e:2x2
jax: 0.10.0
libtpu: 0.0.40
codegen_flags: <defaults>
</compile_context>

<pallas_src>
import jax
import jax.numpy as jnp
from jax.experimental import pallas as pl
from jax.experimental.pallas import tpu as pltpu

BERT_H = 768      # bert-base hidden size
Y_DIM = 130       # extra feature vector
HID = 1000        # first Linear output
HID_PAD = 1024    # padded to a multiple of 128 (lane dim)
SEQ = 8           # small synthetic sequence length


def disc_kernel(x_ref, w1h_ref, b1_ref, w2_ref, b2_ref, out_ref):
    # First Linear: (M_BLK, 768) bf16 @ (768, 1024) bf16 -> f32 on the MXU.
    z = jnp.dot(x_ref[...], w1h_ref[...], preferred_element_type=jnp.float32)
    z = z + b1_ref[...]               # folded bias: b1 + W1_y @ y  (f32)
    z = jax.nn.sigmoid(z)             # nn.Sigmoid (f32)
    # Linear(1000 -> 1): VPU multiply + lane reduction.  Padded lanes of z are
    # sigmoid(0)=0.5 but w2 is zero-padded there, so they add 0.
    out_ref[...] = jnp.sum(z * w2_ref[...], axis=-1, keepdims=True) + b2_ref[...]


def disc_forward(hidden, y, positions, params):
    """hidden:    (S, 768) f32  -- BERT last_hidden_state for batch 0
       y:         (130,)   f32
       positions: (M,) int      -- token positions (batched inference; M=1 ok)
       params:    (w1 (1000,898), b1 (1000,), w2 (1,1000), b2 (1,)) PyTorch layout
       returns:   (M, 1) f32, row m == disc.forward(x, y, positions[m])
    """
    w1, b1, w2, b2 = params
    M = positions.shape[0]

    # Batch tile: up to 128 rows per grid step, sublane-aligned (multiple of 8).
    M_BLK = min(128, ((M + 7) // 8) * 8)
    Mp = ((M + M_BLK - 1) // M_BLK) * M_BLK
    n_steps = Mp // M_BLK

    # ---- weight prep (host-side, f32; only the heavy matmul operand is bf16)
    w1t = w1.T                                                      # (898, 1000)
    w1h = jnp.zeros((BERT_H, HID_PAD), jnp.float32).at[:, :HID].set(w1t[:BERT_H])
    w1h = w1h.astype(jnp.bfloat16)                                  # (768, 1024) bf16
    b1_eff = b1 + w1[:, BERT_H:] @ y                                # fold y @ W1_y.T into bias (f32)
    b1p = jnp.zeros((1, HID_PAD), jnp.float32).at[:, :HID].set(b1_eff)
    w2p = jnp.zeros((1, HID_PAD), jnp.float32).at[:, :HID].set(w2[0])
    b2p = b2.reshape(1, 1).astype(jnp.float32)

    # ---- gather x = hidden[pos, :] in the wrapper; pad the batch with pos=0
    pos_pad = jnp.zeros((Mp,), jnp.int32).at[:M].set(positions.astype(jnp.int32))
    x = hidden[pos_pad].astype(jnp.bfloat16)                        # (Mp, 768) bf16

    def const(shape):
        # full-array block with a constant index map -> DMA'd once, resident
        # in VMEM across the whole batch grid
        return pl.BlockSpec(shape, lambda i: tuple(0 for _ in shape))

    # Weight-DMA-bound at small M: avoid duplicating the resident weights per
    # TensorCore (v7x megacore) unless there is enough work to shard.
    sem = "parallel" if n_steps >= 4 else "arbitrary"

    out = pl.pallas_call(
        disc_kernel,
        out_shape=jax.ShapeDtypeStruct((Mp, 1), jnp.float32),
        grid=(n_steps,),
        in_specs=[
            pl.BlockSpec((M_BLK, BERT_H), lambda i: (i, 0)),   # gathered rows (bf16)
            const((BERT_H, HID_PAD)),                          # W1 hidden part (bf16)
            const((1, HID_PAD)),                               # folded bias b1_eff (f32)
            const((1, HID_PAD)),                               # W2 lane-major (f32)
            const((1, 1)),                                     # b2
        ],
        out_specs=pl.BlockSpec((M_BLK, 1), lambda i: (i, 0)),
        compiler_params=pltpu.CompilerParams(dimension_semantics=(sem,)),
    )(x, w1h, b1p, w2p, b2p)
    return out[:M]


def reference_forward(hidden, y, positions, params):
    w1, b1, w2, b2 = params
    x = hidden[positions]                                    # (M, 768)
    yb = jnp.broadcast_to(y, (x.shape[0], y.shape[0]))       # shared y
    cat = jnp.concatenate([x, yb], axis=-1)                  # torch.cat
    h = jax.nn.sigmoid(cat @ w1.T + b1)                      # Linear + Sigmoid
    return h @ w2.T + b2                                     # Linear -> (M, 1)


if __name__ == "__main__":
    key = jax.random.PRNGKey(0)
    k_hid, k_y, k_w1, k_b1, k_w2, k_b2 = jax.random.split(key, 6)

    # Synthetic stand-in for bert(x)['last_hidden_state'][0] (frozen, deterministic)
    hidden = jax.random.normal(k_hid, (SEQ, BERT_H), dtype=jnp.float32)
    y = jax.random.normal(k_y, (Y_DIM,), dtype=jnp.float32)
    positions = jnp.array([3, 0, 5, 7, 1, 2, 6, 4, 3, 3, 0, 7, 2, 5, 1, 6],
                          dtype=jnp.int32)

    # Deterministic init of the `scalar` head (nn.Linear weight layout: (out, in))
    w1 = jax.random.normal(k_w1, (HID, BERT_H + Y_DIM), dtype=jnp.float32) * 0.02
    b1 = jax.random.normal(k_b1, (HID,), dtype=jnp.float32) * 0.02
    w2 = jax.random.normal(k_w2, (1, HID), dtype=jnp.float32) * 0.02
    b2 = jax.random.normal(k_b2, (1,), dtype=jnp.float32) * 0.02
    params = (w1, b1, w2, b2)

    out = disc_forward(hidden, y, positions, params)
    out = jax.block_until_ready(out)

    ref = reference_forward(hidden, y, positions, params)
    assert out.shape == (positions.shape[0], 1)
    assert jnp.allclose(out, ref, rtol=1e-2, atol=1e-2), (out, ref)

    print("KERNEL_OK")
</pallas_src>

<mosaic_0001>
module attributes {stable_mosaic.version = 11 : i64} {
  func.func @disc_kernel(%arg0: i32, %arg1: memref<16x768xbf16, #tpu.memory_space<vmem>>, %arg2: memref<768x1024xbf16, #tpu.memory_space<vmem>>, %arg3: memref<1x1024xf32, #tpu.memory_space<vmem>>, %arg4: memref<1x1024xf32, #tpu.memory_space<vmem>>, %arg5: memref<1x1xf32, #tpu.memory_space<vmem>>, %arg6: memref<16x1xf32, #tpu.memory_space<vmem>>) attributes {dimension_semantics = [#tpu.dimension_semantics<arbitrary>], iteration_bounds = array<i64: 1>, scalar_prefetch = 0 : i64, scratch_operands = 0 : i64, tpu.core_type = #tpu.core_type<tc>, window_params = [{transform_indices = @transform_0, window_bounds = array<i64: 16, 768>}, {pipeline_mode = #tpu.pipeline_mode<synchronous>, transform_indices = @transform_1, window_bounds = array<i64: 768, 1024>}, {pipeline_mode = #tpu.pipeline_mode<synchronous>, transform_indices = @transform_2, window_bounds = array<i64: 1, 1024>}, {pipeline_mode = #tpu.pipeline_mode<synchronous>, transform_indices = @transform_3, window_bounds = array<i64: 1, 1024>}, {pipeline_mode = #tpu.pipeline_mode<synchronous>, transform_indices = @transform_4, window_bounds = array<i64: 1, 1>}, {transform_indices = @transform_5, window_bounds = array<i64: 16, 1>}]} {
    %c0 = arith.constant 0 : index
    %c0_0 = arith.constant 0 : index
    %0 = vector.load %arg1[%c0, %c0_0] : memref<16x768xbf16, #tpu.memory_space<vmem>>, vector<16x768xbf16>
    %c0_1 = arith.constant 0 : index
    %c0_2 = arith.constant 0 : index
    %1 = vector.load %arg2[%c0_1, %c0_2] : memref<768x1024xbf16, #tpu.memory_space<vmem>>, vector<768x1024xbf16>
    %cst = arith.constant dense<0.000000e+00> : vector<16x1024xf32>
    %2 = tpu.matmul %0, %1, %cst {dimension_numbers = #tpu.dot_dimension_numbers<[1], [0], [0], [1], [0, 0, 1, 1], [], []>} : vector<16x768xbf16>, vector<768x1024xbf16>, vector<16x1024xf32> -> vector<16x1024xf32>
    %c0_3 = arith.constant 0 : index
    %c0_4 = arith.constant 0 : index
    %3 = vector.load %arg3[%c0_3, %c0_4] : memref<1x1024xf32, #tpu.memory_space<vmem>>, vector<1x1024xf32>
    %4 = vector.broadcast %3 : vector<1x1024xf32> to vector<16x1024xf32>
    %5 = arith.addf %2, %4 : vector<16x1024xf32>
    %6 = arith.negf %5 : vector<16x1024xf32>
    %7 = math.exp %6 : vector<16x1024xf32>
    %cst_5 = arith.constant 1.000000e+00 : f32
    %8 = vector.broadcast %cst_5 : f32 to vector<16x1024xf32>
    %9 = arith.addf %8, %7 : vector<16x1024xf32>
    %10 = arith.divf %8, %9 : vector<16x1024xf32>
    %c0_6 = arith.constant 0 : index
    %c0_7 = arith.constant 0 : index
    %11 = vector.load %arg4[%c0_6, %c0_7] : memref<1x1024xf32, #tpu.memory_space<vmem>>, vector<1x1024xf32>
    %12 = vector.broadcast %11 : vector<1x1024xf32> to vector<16x1024xf32>
    %13 = arith.mulf %10, %12 : vector<16x1024xf32>
    %cst_8 = arith.constant dense<0.000000e+00> : vector<16xf32>
    %14 = vector.multi_reduction <add>, %13, %cst_8 [1] : vector<16x1024xf32> to vector<16xf32>
    %15 = vector.shape_cast %14 : vector<16xf32> to vector<16x1xf32>
    %c0_9 = arith.constant 0 : index
    %c0_10 = arith.constant 0 : index
    %16 = vector.load %arg5[%c0_9, %c0_10] : memref<1x1xf32, #tpu.memory_space<vmem>>, vector<1x1xf32>
    %17 = vector.broadcast %16 : vector<1x1xf32> to vector<16x1xf32>
    %18 = arith.addf %15, %17 : vector<16x1xf32>
    %c0_11 = arith.constant 0 : index
    %c0_12 = arith.constant 0 : index
    %19 = vector.load %arg6[%c0_11, %c0_12] : memref<16x1xf32, #tpu.memory_space<vmem>>, vector<16x1xf32>
    tpu.vector_store %arg6[%c0_11, %c0_12], %18 {strides = array<i32>} : memref<16x1xf32, #tpu.memory_space<vmem>>, vector<16x1xf32>,
    return
  }
  func.func @transform_0(%arg0: i32) -> (i32, i32) {
    %c0_i32 = arith.constant 0 : i32
    %c0_i32_0 = arith.constant 0 : i32
    return %arg0, %c0_i32 : i32, i32
  }
  func.func @transform_1(%arg0: i32) -> (i32, i32) {
    %c0_i32 = arith.constant 0 : i32
    %c0_i32_0 = arith.constant 0 : i32
    %c0_i32_1 = arith.constant 0 : i32
    return %c0_i32, %c0_i32_0 : i32, i32
  }
  func.func @transform_2(%arg0: i32) -> (i32, i32) {
    %c0_i32 = arith.constant 0 : i32
    %c0_i32_0 = arith.constant 0 : i32
    %c0_i32_1 = arith.constant 0 : i32
    return %c0_i32, %c0_i32_0 : i32, i32
  }
  func.func @transform_3(%arg0: i32) -> (i32, i32) {
    %c0_i32 = arith.constant 0 : i32
    %c0_i32_0 = arith.constant 0 : i32
    %c0_i32_1 = arith.constant 0 : i32
    return %c0_i32, %c0_i32_0 : i32, i32
  }
  func.func @transform_4(%arg0: i32) -> (i32, i32) {
    %c0_i32 = arith.constant 0 : i32
    %c0_i32_0 = arith.constant 0 : i32
    %c0_i32_1 = arith.constant 0 : i32
    return %c0_i32, %c0_i32_0 : i32, i32
  }
  func.func @transform_5(%arg0: i32) -> (i32, i32) {
    %c0_i32 = arith.constant 0 : i32
    %c0_i32_0 = arith.constant 0 : i32
    return %arg0, %c0_i32 : i32, i32
  }
}

</mosaic_0001>

<llo_original>
// kernel: tpu_custom_call.1
$region0: #{tpu_custom_call.1}
  #allocation0 [shape = 'u32[]', space=smem, size = 0x4, offset = 0x4, fixed_abs, tag = 'smem constant byte address 0x4 - core index']
  #allocation1 [shape = 'u32[72,128]{1,0:T(1,128)}', space=vmem, size = 0x9000, scoped, tag = 'internal scratch']
  #allocation2 [shape = 'f32[1,1]{1,0:T(1,128)S(1)}', space=vmem, size = 0x200, scoped, tag = 'scoped memory for tpu_custom_call.1']
  %s0 = inlined_call_operand.hbm [shape: bf16[16,768], index: 0, kind: input, shape index: {}]
  %s1 = inlined_call_operand.hbm [shape: bf16[768,1024], index: 1, kind: input, shape index: {}]
  %s2 = inlined_call_operand.hbm [shape: f32[1,1024], index: 2, kind: input, shape index: {}]
  %s3 = inlined_call_operand.hbm [shape: f32[1,1024], index: 3, kind: input, shape index: {}]
  %s4 = inlined_call_operand.<no memory space> [shape: f32[1,1], index: 4, kind: input, shape index: {}]
  %s5 = inlined_call_operand.vmem [shape: f32[16,1], index: 5, kind: output, shape index: {}]
  %s6 = sld [smem:[#allocation0]]
  $region46: #{tpu_custom_call.1} parent=0
    _
  %s8 = ssub.s32 1, %s6
  %s9 = scalar_select 0, %s8, %s6
  %v10 = vstv %s4
  %11 = vst [vmem:[#allocation2] sm:$0x1] %v10
  $region1: #{tpu_custom_call.1} parent=0
    #allocation3 [shape = 'u8[24576]{0}', space=vmem, size = 0x6000, scoped, tag = 'input window, operand 0, single buffered']
    #allocation4 [shape = 's32[1]{0}', space=sflag, size = 0x4, scoped, tag = 'scoped memory for tpu_custom_call.1']
    #allocation5 [shape = 'u8[1572864]{0}', space=vmem, size = 0x180000, scoped, tag = 'input window, operand 1, single buffered']
    #allocation6 [shape = 's32[1]{0}', space=sflag, size = 0x4, scoped, tag = 'scoped memory for tpu_custom_call.1']
    #allocation7 [shape = 'u8[4096]{0}', space=vmem, size = 0x1000, scoped, tag = 'input window, operand 2, single buffered']
    #allocation8 [shape = 'u8[4096]{0}', space=vmem, size = 0x1000, scoped, tag = 'input window, operand 3, single buffered']
    #allocation9 [shape = 's32[1]{0}', space=sflag, size = 0x4, scoped, tag = 'scoped memory for tpu_custom_call.1']
    %12 = vsyncpa [#allocation4], 0
    %13 = vsyncpa [#allocation6], 0
    %14 = vsyncpa [#allocation9], 0
    // Predicated region
    $region2: #{tpu_custom_call.1} parent=1 // pred_check
      _
    $region3: #{tpu_custom_call.1} parent=1 // pred_check_branch
      %16 = sbr.rel (0) target = $region5
    $region4: #{tpu_custom_call.1} parent=1 // pred_region
      %18 = vsyncadd [#allocation4], 0
      %s19 = sshll.u32 %s0, 4
      %s20 = int_to_ptr.hbm [resolvable:$true] %s19
      %s21 = sshll.u32 [#allocation3], 4
      %s22 = int_to_ptr.vmem [resolvable:$true] %s21
      %27 = dma.hbm_to_vmem [thread:$0]  %s20, 768, %s22, [#allocation4], 384, 384, 24
    $region5: #{tpu_custom_call.1} parent=1 // pred_fallthru
      _
    // Predicated region
    $region6: #{tpu_custom_call.1} parent=1 // pred_check
      _
    $region7: #{tpu_custom_call.1} parent=1 // pred_check_branch
      %29 = sbr.rel (0) target = $region9
    $region8: #{tpu_custom_call.1} parent=1 // pred_region
      %31 = vsyncadd [#allocation6], 0
      %s32 = sshll.u32 %s1, 4
      %s33 = int_to_ptr.hbm [resolvable:$true] %s32
      %s34 = sshll.u32 [#allocation5], 4
      %s35 = int_to_ptr.vmem [resolvable:$true] %s34
      %40 = dma.hbm_to_vmem [thread:$0]  %s33, 49152, %s35, [#allocation6], 512, 512, 32
    $region9: #{tpu_custom_call.1} parent=1 // pred_fallthru
      _
    // Predicated region
    $region10: #{tpu_custom_call.1} parent=1 // pred_check
      _
    $region11: #{tpu_custom_call.1} parent=1 // pred_check_branch
      %42 = sbr.rel (0) target = $region13
    $region12: #{tpu_custom_call.1} parent=1 // pred_region
      %44 = vsyncadd [#allocation6], 0
      %s46 = sshll.u32 %s2, 4
      %s47 = int_to_ptr.hbm [resolvable:$true] %s46
      %s48 = sshll.u32 [#allocation7], 4
      %s49 = int_to_ptr.vmem [resolvable:$true] %s48
      %51 = dma.hbm_to_vmem [thread:$0]  %s47, 128, %s49, [#allocation6]
    $region13: #{tpu_custom_call.1} parent=1 // pred_fallthru
      _
    // Predicated region
    $region14: #{tpu_custom_call.1} parent=1 // pred_check
      _
    $region15: #{tpu_custom_call.1} parent=1 // pred_check_branch
      %53 = sbr.rel (0) target = $region17
    $region16: #{tpu_custom_call.1} parent=1 // pred_region
      %55 = vsyncadd [#allocation9], 0
      %s57 = sshll.u32 %s3, 4
      %s58 = int_to_ptr.hbm [resolvable:$true] %s57
      %s59 = sshll.u32 [#allocation8], 4
      %s60 = int_to_ptr.vmem [resolvable:$true] %s59
      %62 = dma.hbm_to_vmem [thread:$0]  %s58, 128, %s60, [#allocation9]
    $region17: #{tpu_custom_call.1} parent=1 // pred_fallthru
      _
    // Predicated region
    $region18: #{tpu_custom_call.1} parent=1 // pred_check
      _
    $region19: #{tpu_custom_call.1} parent=1 // pred_check_branch
      %64 = sbr.rel (0) target = $region21
    $region20: #{tpu_custom_call.1} parent=1 // pred_region
      _
    $region21: #{tpu_custom_call.1} parent=1 // pred_fallthru
      _
    // Predicated region
    $region22: #{tpu_custom_call.1} parent=1 // pred_check
      _
    $region23: #{tpu_custom_call.1} parent=1 // pred_check_branch
      %66 = sbr.rel (0) target = $region25
    $region24: #{tpu_custom_call.1} parent=1 // pred_region
      %68 = dma.done [#allocation4], 768
    $region25: #{tpu_custom_call.1} parent=1 // pred_fallthru
      _
    // Predicated region
    $region26: #{tpu_custom_call.1} parent=1 // pred_check
      _
    $region27: #{tpu_custom_call.1} parent=1 // pred_check_branch
      %70 = sbr.rel (0) target = $region29
    $region28: #{tpu_custom_call.1} parent=1 // pred_region
      %72 = dma.done [#allocation6], 49152
    $region29: #{tpu_custom_call.1} parent=1 // pred_fallthru
      _
    // Predicated region
    $region30: #{tpu_custom_call.1} parent=1 // pred_check
      _
    $region31: #{tpu_custom_call.1} parent=1 // pred_check_branch
      %74 = sbr.rel (0) target = $region33
    $region32: #{tpu_custom_call.1} parent=1 // pred_region
      %76 = dma.done [#allocation6], 128
    $region33: #{tpu_custom_call.1} parent=1 // pred_fallthru
      _
    // Predicated region
    $region34: #{tpu_custom_call.1} parent=1 // pred_check
      _
    $region35: #{tpu_custom_call.1} parent=1 // pred_check_branch
      %78 = sbr.rel (0) target = $region37
    $region36: #{tpu_custom_call.1} parent=1 // pred_region
      %80 = dma.done [#allocation9], 128
    $region37: #{tpu_custom_call.1} parent=1 // pred_fallthru
      _
    %v81 = vld [vmem:[#allocation3] sm:$0xff]
    %v82 = vld [vmem:[#allocation3 + $0x8] sm:$0xff]
    %v83 = vld [vmem:[#allocation3 + $0x10] sm:$0xff]
    %v84 = vld [vmem:[#allocation3 + $0x18] sm:$0xff]
    %v85 = vld [vmem:[#allocation3 + $0x20] sm:$0xff]
    %v86 = vld [vmem:[#allocation3 + $0x28] sm:$0xff]
    %v87 = vld [vmem:[#allocation5] sm:$0xff]
    %v88 = vld [vmem:[#allocation5 + $0x8] sm:$0xff]
    %v89 = vld [vmem:[#allocation5 + $0x10] sm:$0xff]
    %v90 = vld [vmem:[#allocation5 + $0x18] sm:$0xff]
    %v91 = vld [vmem:[#allocation5 + $0x20] sm:$0xff]
    %v92 = vld [vmem:[#allocation5 + $0x28] sm:$0xff]
    %v93 = vld [vmem:[#allocation5 + $0x30] sm:$0xff]
    %v94 = vld [vmem:[#allocation5 + $0x38] sm:$0xff]
    %v95 = vld [vmem:[#allocation5 + $0x40] sm:$0xff]
    %v96 = vld [vmem:[#allocation5 + $0x48] sm:$0xff]
    %v97 = vld [vmem:[#allocation5 + $0x50] sm:$0xff]
    %v98 = vld [vmem:[#allocation5 + $0x58] sm:$0xff]
    %v99 = vld [vmem:[#allocation5 + $0x60] sm:$0xff]
    %v100 = vld [vmem:[#allocation5 + $0x68] sm:$0xff]
    %v101 = vld [vmem:[#allocation5 + $0x70] sm:$0xff]
    %v102 = vld [vmem:[#allocation5 + $0x78] sm:$0xff]
    %v103 = vld [vmem:[#allocation5 + $0x80] sm:$0xff]
    %v104 = vld [vmem:[#allocation5 + $0x88] sm:$0xff]
    %v105 = vld [vmem:[#allocation5 + $0x90] sm:$0xff]
    %v106 = vld [vmem:[#allocation5 + $0x98] sm:$0xff]
    %v107 = vld [vmem:[#allocation5 + $0xa0] sm:$0xff]
    %v108 = vld [vmem:[#allocation5 + $0xa8] sm:$0xff]
    %v109 = vld [vmem:[#allocation5 + $0xb0] sm:$0xff]
    %v110 = vld [vmem:[#allocation5 + $0xb8] sm:$0xff]
    %v111 = vld [vmem:[#allocation5 + $0xc0] sm:$0xff]
    %v112 = vld [vmem:[#allocation5 + $0xc8] sm:$0xff]
    %v113 = vld [vmem:[#allocation5 + $0xd0] sm:$0xff]
    %v114 = vld [vmem:[#allocation5 + $0xd8] sm:$0xff]
    %v115 = vld [vmem:[#allocation5 + $0xe0] sm:$0xff]
    %v116 = vld [vmem:[#allocation5 + $0xe8] sm:$0xff]
    %v117 = vld [vmem:[#allocation5 + $0xf0] sm:$0xff]
    %v118 = vld [vmem:[#allocation5 + $0xf8] sm:$0xff]
    %v119 = vld [vmem:[#allocation5 + $0x100] sm:$0xff]
    %v120 = vld [vmem:[#allocation5 + $0x108] sm:$0xff]
    %v121 = vld [vmem:[#allocation5 + $0x110] sm:$0xff]
    %v122 = vld [vmem:[#allocation5 + $0x118] sm:$0xff]
    %v123 = vld [vmem:[#allocation5 + $0x120] sm:$0xff]
    %v124 = vld [vmem:[#allocation5 + $0x128] sm:$0xff]
    %v125 = vld [vmem:[#allocation5 + $0x130] sm:$0xff]
    %v126 = vld [vmem:[#allocation5 + $0x138] sm:$0xff]
    %v127 = vld [vmem:[#allocation5 + $0x140] sm:$0xff]
    %v128 = vld [vmem:[#allocation5 + $0x148] sm:$0xff]
    %v129 = vld [vmem:[#allocation5 + $0x150] sm:$0xff]
    %v130 = vld [vmem:[#allocation5 + $0x158] sm:$0xff]
    %v131 = vld [vmem:[#allocation5 + $0x160] sm:$0xff]
    %v132 = vld [vmem:[#allocation5 + $0x168] sm:$0xff]
    %v133 = vld [vmem:[#allocation5 + $0x170] sm:$0xff]
    %v134 = vld [vmem:[#allocation5 + $0x178] sm:$0xff]
    %v135 = vld [vmem:[#allocation5 + $0x180] sm:$0xff]
    %v136 = vld [vmem:[#allocation5 + $0x188] sm:$0xff]
    %v137 = vld [vmem:[#allocation5 + $0x190] sm:$0xff]
    %v138 = vld [vmem:[#allocation5 + $0x198] sm:$0xff]
    %v139 = vld [vmem:[#allocation5 + $0x1a0] sm:$0xff]
    %v140 = vld [vmem:[#allocation5 + $0x1a8] sm:$0xff]
    %v141 = vld [vmem:[#allocation5 + $0x1b0] sm:$0xff]
    %v142 = vld [vmem:[#allocation5 + $0x1b8] sm:$0xff]
    %v143 = vld [vmem:[#allocation5 + $0x1c0] sm:$0xff]
    %v144 = vld [vmem:[#allocation5 + $0x1c8] sm:$0xff]
    %v145 = vld [vmem:[#allocation5 + $0x1d0] sm:$0xff]
    %v146 = vld [vmem:[#allocation5 + $0x1d8] sm:$0xff]
    %v147 = vld [vmem:[#allocation5 + $0x1e0] sm:$0xff]
    %v148 = vld [vmem:[#allocation5 + $0x1e8] sm:$0xff]
    %v149 = vld [vmem:[#allocation5 + $0x1f0] sm:$0xff]
    %v150 = vld [vmem:[#allocation5 + $0x1f8] sm:$0xff]
    %v151 = vld [vmem:[#allocation5 + $0x200] sm:$0xff]
    %v152 = vld [vmem:[#allocation5 + $0x208] sm:$0xff]
    %v153 = vld [vmem:[#allocation5 + $0x210] sm:$0xff]
    %v154 = vld [vmem:[#allocation5 + $0x218] sm:$0xff]
    %v155 = vld [vmem:[#allocation5 + $0x220] sm:$0xff]
    %v156 = vld [vmem:[#allocation5 + $0x228] sm:$0xff]
    %v157 = vld [vmem:[#allocation5 + $0x230] sm:$0xff]
    %v158 = vld [vmem:[#allocation5 + $0x238] sm:$0xff]
    %v159 = vld [vmem:[#allocation5 + $0x240] sm:$0xff]
    %v160 = vld [vmem:[#allocation5 + $0x248] sm:$0xff]
    %v161 = vld [vmem:[#allocation5 + $0x250] sm:$0xff]
    %v162 = vld [vmem:[#allocation5 + $0x258] sm:$0xff]
    %v163 = vld [vmem:[#allocation5 + $0x260] sm:$0xff]
    %v164 = vld [vmem:[#allocation5 + $0x268] sm:$0xff]
    %v165 = vld [vmem:[#allocation5 + $0x270] sm:$0xff]
    %v166 = vld [vmem:[#allocation5 + $0x278] sm:$0xff]
    %v167 = vld [vmem:[#allocation5 + $0x280] sm:$0xff]
    %v168 = vld [vmem:[#allocation5 + $0x288] sm:$0xff]
    %v169 = vld [vmem:[#allocation5 + $0x290] sm:$0xff]
    %v170 = vld [vmem:[#allocation5 + $0x298] sm:$0xff]
    %v171 = vld [vmem:[#allocation5 + $0x2a0] sm:$0xff]
    %v172 = vld [vmem:[#allocation5 + $0x2a8] sm:$0xff]
    %v173 = vld [vmem:[#allocation5 + $0x2b0] sm:$0xff]
    %v174 = vld [vmem:[#allocation5 + $0x2b8] sm:$0xff]
    %v175 = vld [vmem:[#allocation5 + $0x2c0] sm:$0xff]
    %v176 = vld [vmem:[#allocation5 + $0x2c8] sm:$0xff]
    %v177 = vld [vmem:[#allocation5 + $0x2d0] sm:$0xff]
    %v178 = vld [vmem:[#allocation5 + $0x2d8] sm:$0xff]
    %v179 = vld [vmem:[#allocation5 + $0x2e0] sm:$0xff]
    %v180 = vld [vmem:[#allocation5 + $0x2e8] sm:$0xff]
    %v181 = vld [vmem:[#allocation5 + $0x2f0] sm:$0xff]
    %v182 = vld [vmem:[#allocation5 + $0x2f8] sm:$0xff]
    %v183 = vld [vmem:[#allocation5 + $0x300] sm:$0xff]
    %v184 = vld [vmem:[#allocation5 + $0x308] sm:$0xff]
    %v185 = vld [vmem:[#allocation5 + $0x310] sm:$0xff]
    %v186 = vld [vmem:[#allocation5 + $0x318] sm:$0xff]
    %v187 = vld [vmem:[#allocation5 + $0x320] sm:$0xff]
    %v188 = vld [vmem:[#allocation5 + $0x328] sm:$0xff]
    %v189 = vld [vmem:[#allocation5 + $0x330] sm:$0xff]
    %v190 = vld [vmem:[#allocation5 + $0x338] sm:$0xff]
    %v191 = vld [vmem:[#allocation5 + $0x340] sm:$0xff]
    %v192 = vld [vmem:[#allocation5 + $0x348] sm:$0xff]
    %v193 = vld [vmem:[#allocation5 + $0x350] sm:$0xff]
    %v194 = vld [vmem:[#allocation5 + $0x358] sm:$0xff]
    %v195 = vld [vmem:[#allocation5 + $0x360] sm:$0xff]
    %v196 = vld [vmem:[#allocation5 + $0x368] sm:$0xff]
    %v197 = vld [vmem:[#allocation5 + $0x370] sm:$0xff]
    %v198 = vld [vmem:[#allocation5 + $0x378] sm:$0xff]
    %v199 = vld [vmem:[#allocation5 + $0x380] sm:$0xff]
    %v200 = vld [vmem:[#allocation5 + $0x388] sm:$0xff]
    %v201 = vld [vmem:[#allocation5 + $0x390] sm:$0xff]
    %v202 = vld [vmem:[#allocation5 + $0x398] sm:$0xff]
    %v203 = vld [vmem:[#allocation5 + $0x3a0] sm:$0xff]
    %v204 = vld [vmem:[#allocation5 + $0x3a8] sm:$0xff]
    %v205 = vld [vmem:[#allocation5 + $0x3b0] sm:$0xff]
    %v206 = vld [vmem:[#allocation5 + $0x3b8] sm:$0xff]
    %v207 = vld [vmem:[#allocation5 + $0x3c0] sm:$0xff]
    %v208 = vld [vmem:[#allocation5 + $0x3c8] sm:$0xff]
    %v209 = vld [vmem:[#allocation5 + $0x3d0] sm:$0xff]
    %v210 = vld [vmem:[#allocation5 + $0x3d8] sm:$0xff]
    %v211 = vld [vmem:[#allocation5 + $0x3e0] sm:$0xff]
    %v212 = vld [vmem:[#allocation5 + $0x3e8] sm:$0xff]
    %v213 = vld [vmem:[#allocation5 + $0x3f0] sm:$0xff]
    %v214 = vld [vmem:[#allocation5 + $0x3f8] sm:$0xff]
    %v215 = vld [vmem:[#allocation5 + $0x400] sm:$0xff]
    %v216 = vld [vmem:[#allocation5 + $0x408] sm:$0xff]
    %v217 = vld [vmem:[#allocation5 + $0x410] sm:$0xff]
    %v218 = vld [vmem:[#allocation5 + $0x418] sm:$0xff]
    %v219 = vld [vmem:[#allocation5 + $0x420] sm:$0xff]
    %v220 = vld [vmem:[#allocation5 + $0x428] sm:$0xff]
    %v221 = vld [vmem:[#allocation5 + $0x430] sm:$0xff]
    %v222 = vld [vmem:[#allocation5 + $0x438] sm:$0xff]
    %v223 = vld [vmem:[#allocation5 + $0x440] sm:$0xff]
    %v224 = vld [vmem:[#allocation5 + $0x448] sm:$0xff]
    %v225 = vld [vmem:[#allocation5 + $0x450] sm:$0xff]
    %v226 = vld [vmem:[#allocation5 + $0x458] sm:$0xff]
    %v227 = vld [vmem:[#allocation5 + $0x460] sm:$0xff]
    %v228 = vld [vmem:[#allocation5 + $0x468] sm:$0xff]
    %v229 = vld [vmem:[#allocation5 + $0x470] sm:$0xff]
    %v230 = vld [vmem:[#allocation5 + $0x478] sm:$0xff]
    %v231 = vld [vmem:[#allocation5 + $0x480] sm:$0xff]
    %v232 = vld [vmem:[#allocation5 + $0x488] sm:$0xff]
    %v233 = vld [vmem:[#allocation5 + $0x490] sm:$0xff]
    %v234 = vld [vmem:[#allocation5 + $0x498] sm:$0xff]
    %v235 = vld [vmem:[#allocation5 + $0x4a0] sm:$0xff]
    %v236 = vld [vmem:[#allocation5 + $0x4a8] sm:$0xff]
    %v237 = vld [vmem:[#allocation5 + $0x4b0] sm:$0xff]
    %v238 = vld [vmem:[#allocation5 + $0x4b8] sm:$0xff]
    %v239 = vld [vmem:[#allocation5 + $0x4c0] sm:$0xff]
    %v240 = vld [vmem:[#allocation5 + $0x4c8] sm:$0xff]
    %v241 = vld [vmem:[#allocation5 + $0x4d0] sm:$0xff]
    %v242 = vld [vmem:[#allocation5 + $0x4d8] sm:$0xff]
    %v243 = vld [vmem:[#allocation5 + $0x4e0] sm:$0xff]
    %v244 = vld [vmem:[#allocation5 + $0x4e8] sm:$0xff]
    %v245 = vld [vmem:[#allocation5 + $0x4f0] sm:$0xff]
    %v246 = vld [vmem:[#allocation5 + $0x4f8] sm:$0xff]
    %v247 = vld [vmem:[#allocation5 + $0x500] sm:$0xff]
    %v248 = vld [vmem:[#allocation5 + $0x508] sm:$0xff]
    %v249 = vld [vmem:[#allocation5 + $0x510] sm:$0xff]
    %v250 = vld [vmem:[#allocation5 + $0x518] sm:$0xff]
    %v251 = vld [vmem:[#allocation5 + $0x520] sm:$0xff]
    %v252 = vld [vmem:[#allocation5 + $0x528] sm:$0xff]
    %v253 = vld [vmem:[#allocation5 + $0x530] sm:$0xff]
    %v254 = vld [vmem:[#allocation5 + $0x538] sm:$0xff]
    %v255 = vld [vmem:[#allocation5 + $0x540] sm:$0xff]
    %v256 = vld [vmem:[#allocation5 + $0x548] sm:$0xff]
    %v257 = vld [vmem:[#allocation5 + $0x550] sm:$0xff]
    %v258 = vld [vmem:[#allocation5 + $0x558] sm:$0xff]
    %v259 = vld [vmem:[#allocation5 + $0x560] sm:$0xff]
    %v260 = vld [vmem:[#allocation5 + $0x568] sm:$0xff]
    %v261 = vld [vmem:[#allocation5 + $0x570] sm:$0xff]
    %v262 = vld [vmem:[#allocation5 + $0x578] sm:$0xff]
    %v263 = vld [vmem:[#allocation5 + $0x580] sm:$0xff]
    %v264 = vld [vmem:[#allocation5 + $0x588] sm:$0xff]
    %v265 = vld [vmem:[#allocation5 + $0x590] sm:$0xff]
    %v266 = vld [vmem:[#allocation5 + $0x598] sm:$0xff]
    %v267 = vld [vmem:[#allocation5 + $0x5a0] sm:$0xff]
    %v268 = vld [vmem:[#allocation5 + $0x5a8] sm:$0xff]
    %v269 = vld [vmem:[#allocation5 + $0x5b0] sm:$0xff]
    %v270 = vld [vmem:[#allocation5 + $0x5b8] sm:$0xff]
    %v271 = vld [vmem:[#allocation5 + $0x5c0] sm:$0xff]
    %v272 = vld [vmem:[#allocation5 + $0x5c8] sm:$0xff]
    %v273 = vld [vmem:[#allocation5 + $0x5d0] sm:$0xff]
    %v274 = vld [vmem:[#allocation5 + $0x5d8] sm:$0xff]
    %v275 = vld [vmem:[#allocation5 + $0x5e0] sm:$0xff]
    %v276 = vld [vmem:[#allocation5 + $0x5e8] sm:$0xff]
    %v277 = vld [vmem:[#allocation5 + $0x5f0] sm:$0xff]
    %v278 = vld [vmem:[#allocation5 + $0x5f8] sm:$0xff]
    %v279 = vld [vmem:[#allocation5 + $0x600] sm:$0xff]
    %v280 = vld [vmem:[#allocation5 + $0x608] sm:$0xff]
    %v281 = vld [vmem:[#allocation5 + $0x610] sm:$0xff]
    %v282 = vld [vmem:[#allocation5 + $0x618] sm:$0xff]
    %v283 = vld [vmem:[#allocation5 + $0x620] sm:$0xff]
    %v284 = vld [vmem:[#allocation5 + $0x628] sm:$0xff]
    %v285 = vld [vmem:[#allocation5 + $0x630] sm:$0xff]
    %v286 = vld [vmem:[#allocation5 + $0x638] sm:$0xff]
    %v287 = vld [vmem:[#allocation5 + $0x640] sm:$0xff]
    %v288 = vld [vmem:[#allocation5 + $0x648] sm:$0xff]
    %v289 = vld [vmem:[#allocation5 + $0x650] sm:$0xff]
    %v290 = vld [vmem:[#allocation5 + $0x658] sm:$0xff]
    %v291 = vld [vmem:[#allocation5 + $0x660] sm:$0xff]
    %v292 = vld [vmem:[#allocation5 + $0x668] sm:$0xff]
    %v293 = vld [vmem:[#allocation5 + $0x670] sm:$0xff]
    %v294 = vld [vmem:[#allocation5 + $0x678] sm:$0xff]
    %v295 = vld [vmem:[#allocation5 + $0x680] sm:$0xff]
    %v296 = vld [vmem:[#allocation5 + $0x688] sm:$0xff]
    %v297 = vld [vmem:[#allocation5 + $0x690] sm:$0xff]
    %v298 = vld [vmem:[#allocation5 + $0x698] sm:$0xff]
    %v299 = vld [vmem:[#allocation5 + $0x6a0] sm:$0xff]
    %v300 = vld [vmem:[#allocation5 + $0x6a8] sm:$0xff]
    %v301 = vld [vmem:[#allocation5 + $0x6b0] sm:$0xff]
    %v302 = vld [vmem:[#allocation5 + $0x6b8] sm:$0xff]
    %v303 = vld [vmem:[#allocation5 + $0x6c0] sm:$0xff]
    %v304 = vld [vmem:[#allocation5 + $0x6c8] sm:$0xff]
    %v305 = vld [vmem:[#allocation5 + $0x6d0] sm:$0xff]
    %v306 = vld [vmem:[#allocation5 + $0x6d8] sm:$0xff]
    %v307 = vld [vmem:[#allocation5 + $0x6e0] sm:$0xff]
    %v308 = vld [vmem:[#allocation5 + $0x6e8] sm:$0xff]
    %v309 = vld [vmem:[#allocation5 + $0x6f0] sm:$0xff]
    %v310 = vld [vmem:[#allocation5 + $0x6f8] sm:$0xff]
    %v311 = vld [vmem:[#allocation5 + $0x700] sm:$0xff]
    %v312 = vld [vmem:[#allocation5 + $0x708] sm:$0xff]
    %v313 = vld [vmem:[#allocation5 + $0x710] sm:$0xff]
    %v314 = vld [vmem:[#allocation5 + $0x718] sm:$0xff]
    %v315 = vld [vmem:[#allocation5 + $0x720] sm:$0xff]
    %v316 = vld [vmem:[#allocation5 + $0x728] sm:$0xff]
    %v317 = vld [vmem:[#allocation5 + $0x730] sm:$0xff]
    %v318 = vld [vmem:[#allocation5 + $0x738] sm:$0xff]
    %v319 = vld [vmem:[#allocation5 + $0x740] sm:$0xff]
    %v320 = vld [vmem:[#allocation5 + $0x748] sm:$0xff]
    %v321 = vld [vmem:[#allocation5 + $0x750] sm:$0xff]
    %v322 = vld [vmem:[#allocation5 + $0x758] sm:$0xff]
    %v323 = vld [vmem:[#allocation5 + $0x760] sm:$0xff]
    %v324 = vld [vmem:[#allocation5 + $0x768] sm:$0xff]
    %v325 = vld [vmem:[#allocation5 + $0x770] sm:$0xff]
    %v326 = vld [vmem:[#allocation5 + $0x778] sm:$0xff]
    %v327 = vld [vmem:[#allocation5 + $0x780] sm:$0xff]
    %v328 = vld [vmem:[#allocation5 + $0x788] sm:$0xff]
    %v329 = vld [vmem:[#allocation5 + $0x790] sm:$0xff]
    %v330 = vld [vmem:[#allocation5 + $0x798] sm:$0xff]
    %v331 = vld [vmem:[#allocation5 + $0x7a0] sm:$0xff]
    %v332 = vld [vmem:[#allocation5 + $0x7a8] sm:$0xff]
    %v333 = vld [vmem:[#allocation5 + $0x7b0] sm:$0xff]
    %v334 = vld [vmem:[#allocation5 + $0x7b8] sm:$0xff]
    %v335 = vld [vmem:[#allocation5 + $0x7c0] sm:$0xff]
    %v336 = vld [vmem:[#allocation5 + $0x7c8] sm:$0xff]
    %v337 = vld [vmem:[#allocation5 + $0x7d0] sm:$0xff]
    %v338 = vld [vmem:[#allocation5 + $0x7d8] sm:$0xff]
    %v339 = vld [vmem:[#allocation5 + $0x7e0] sm:$0xff]
    %v340 = vld [vmem:[#allocation5 + $0x7e8] sm:$0xff]
    %v341 = vld [vmem:[#allocation5 + $0x7f0] sm:$0xff]
    %v342 = vld [vmem:[#allocation5 + $0x7f8] sm:$0xff]
    %v343 = vld [vmem:[#allocation5 + $0x800] sm:$0xff]
    %v344 = vld [vmem:[#allocation5 + $0x808] sm:$0xff]
    %v345 = vld [vmem:[#allocation5 + $0x810] sm:$0xff]
    %v346 = vld [vmem:[#allocation5 + $0x818] sm:$0xff]
    %v347 = vld [vmem:[#allocation5 + $0x820] sm:$0xff]
    %v348 = vld [vmem:[#allocation5 + $0x828] sm:$0xff]
    %v349 = vld [vmem:[#allocation5 + $0x830] sm:$0xff]
    %v350 = vld [vmem:[#allocation5 + $0x838] sm:$0xff]
    %v351 = vld [vmem:[#allocation5 + $0x840] sm:$0xff]
    %v352 = vld [vmem:[#allocation5 + $0x848] sm:$0xff]
    %v353 = vld [vmem:[#allocation5 + $0x850] sm:$0xff]
    %v354 = vld [vmem:[#allocation5 + $0x858] sm:$0xff]
    %v355 = vld [vmem:[#allocation5 + $0x860] sm:$0xff]
    %v356 = vld [vmem:[#allocation5 + $0x868] sm:$0xff]
    %v357 = vld [vmem:[#allocation5 + $0x870] sm:$0xff]
    %v358 = vld [vmem:[#allocation5 + $0x878] sm:$0xff]
    %v359 = vld [vmem:[#allocation5 + $0x880] sm:$0xff]
    %v360 = vld [vmem:[#allocation5 + $0x888] sm:$0xff]
    %v361 = vld [vmem:[#allocation5 + $0x890] sm:$0xff]
    %v362 = vld [vmem:[#allocation5 + $0x898] sm:$0xff]
    %v363 = vld [vmem:[#allocation5 + $0x8a0] sm:$0xff]
    %v364 = vld [vmem:[#allocation5 + $0x8a8] sm:$0xff]
    %v365 = vld [vmem:[#allocation5 + $0x8b0] sm:$0xff]
    %v366 = vld [vmem:[#allocation5 + $0x8b8] sm:$0xff]
    %v367 = vld [vmem:[#allocation5 + $0x8c0] sm:$0xff]
    %v368 = vld [vmem:[#allocation5 + $0x8c8] sm:$0xff]
    %v369 = vld [vmem:[#allocation5 + $0x8d0] sm:$0xff]
    %v370 = vld [vmem:[#allocation5 + $0x8d8] sm:$0xff]
    %v371 = vld [vmem:[#allocation5 + $0x8e0] sm:$0xff]
    %v372 = vld [vmem:[#allocation5 + $0x8e8] sm:$0xff]
    %v373 = vld [vmem:[#allocation5 + $0x8f0] sm:$0xff]
    %v374 = vld [vmem:[#allocation5 + $0x8f8] sm:$0xff]
    %v375 = vld [vmem:[#allocation5 + $0x900] sm:$0xff]
    %v376 = vld [vmem:[#allocation5 + $0x908] sm:$0xff]
    %v377 = vld [vmem:[#allocation5 + $0x910] sm:$0xff]
    %v378 = vld [vmem:[#allocation5 + $0x918] sm:$0xff]
    %v379 = vld [vmem:[#allocation5 + $0x920] sm:$0xff]
    %v380 = vld [vmem:[#allocation5 + $0x928] sm:$0xff]
    %v381 = vld [vmem:[#allocation5 + $0x930] sm:$0xff]
    %v382 = vld [vmem:[#allocation5 + $0x938] sm:$0xff]
    %v383 = vld [vmem:[#allocation5 + $0x940] sm:$0xff]
    %v384 = vld [vmem:[#allocation5 + $0x948] sm:$0xff]
    %v385 = vld [vmem:[#allocation5 + $0x950] sm:$0xff]
    %v386 = vld [vmem:[#allocation5 + $0x958] sm:$0xff]
    %v387 = vld [vmem:[#allocation5 + $0x960] sm:$0xff]
    %v388 = vld [vmem:[#allocation5 + $0x968] sm:$0xff]
    %v389 = vld [vmem:[#allocation5 + $0x970] sm:$0xff]
    %v390 = vld [vmem:[#allocation5 + $0x978] sm:$0xff]
    %v391 = vld [vmem:[#allocation5 + $0x980] sm:$0xff]
    %v392 = vld [vmem:[#allocation5 + $0x988] sm:$0xff]
    %v393 = vld [vmem:[#allocation5 + $0x990] sm:$0xff]
    %v394 = vld [vmem:[#allocation5 + $0x998] sm:$0xff]
    %v395 = vld [vmem:[#allocation5 + $0x9a0] sm:$0xff]
    %v396 = vld [vmem:[#allocation5 + $0x9a8] sm:$0xff]
    %v397 = vld [vmem:[#allocation5 + $0x9b0] sm:$0xff]
    %v398 = vld [vmem:[#allocation5 + $0x9b8] sm:$0xff]
    %v399 = vld [vmem:[#allocation5 + $0x9c0] sm:$0xff]
    %v400 = vld [vmem:[#allocation5 + $0x9c8] sm:$0xff]
    %v401 = vld [vmem:[#allocation5 + $0x9d0] sm:$0xff]
    %v402 = vld [vmem:[#allocation5 + $0x9d8] sm:$0xff]
    %v403 = vld [vmem:[#allocation5 + $0x9e0] sm:$0xff]
    %v404 = vld [vmem:[#allocation5 + $0x9e8] sm:$0xff]
    %v405 = vld [vmem:[#allocation5 + $0x9f0] sm:$0xff]
    %v406 = vld [vmem:[#allocation5 + $0x9f8] sm:$0xff]
    %v407 = vld [vmem:[#allocation5 + $0xa00] sm:$0xff]
    %v408 = vld [vmem:[#allocation5 + $0xa08] sm:$0xff]
    %v409 = vld [vmem:[#allocation5 + $0xa10] sm:$0xff]
    %v410 = vld [vmem:[#allocation5 + $0xa18] sm:$0xff]
    %v411 = vld [vmem:[#allocation5 + $0xa20] sm:$0xff]
    %v412 = vld [vmem:[#allocation5 + $0xa28] sm:$0xff]
    %v413 = vld [vmem:[#allocation5 + $0xa30] sm:$0xff]
    %v414 = vld [vmem:[#allocation5 + $0xa38] sm:$0xff]
    %v415 = vld [vmem:[#allocation5 + $0xa40] sm:$0xff]
    %v416 = vld [vmem:[#allocation5 + $0xa48] sm:$0xff]
    %v417 = vld [vmem:[#allocation5 + $0xa50] sm:$0xff]
    %v418 = vld [vmem:[#allocation5 + $0xa58] sm:$0xff]
    %v419 = vld [vmem:[#allocation5 + $0xa60] sm:$0xff]
    %v420 = vld [vmem:[#allocation5 + $0xa68] sm:$0xff]
    %v421 = vld [vmem:[#allocation5 + $0xa70] sm:$0xff]
    %v422 = vld [vmem:[#allocation5 + $0xa78] sm:$0xff]
    %v423 = vld [vmem:[#allocation5 + $0xa80] sm:$0xff]
    %v424 = vld [vmem:[#allocation5 + $0xa88] sm:$0xff]
    %v425 = vld [vmem:[#allocation5 + $0xa90] sm:$0xff]
    %v426 = vld [vmem:[#allocation5 + $0xa98] sm:$0xff]
    %v427 = vld [vmem:[#allocation5 + $0xaa0] sm:$0xff]
    %v428 = vld [vmem:[#allocation5 + $0xaa8] sm:$0xff]
    %v429 = vld [vmem:[#allocation5 + $0xab0] sm:$0xff]
    %v430 = vld [vmem:[#allocation5 + $0xab8] sm:$0xff]
    %v431 = vld [vmem:[#allocation5 + $0xac0] sm:$0xff]
    %v432 = vld [vmem:[#allocation5 + $0xac8] sm:$0xff]
    %v433 = vld [vmem:[#allocation5 + $0xad0] sm:$0xff]
    %v434 = vld [vmem:[#allocation5 + $0xad8] sm:$0xff]
    %v435 = vld [vmem:[#allocation5 + $0xae0] sm:$0xff]
    %v436 = vld [vmem:[#allocation5 + $0xae8] sm:$0xff]
    %v437 = vld [vmem:[#allocation5 + $0xaf0] sm:$0xff]
    %v438 = vld [vmem:[#allocation5 + $0xaf8] sm:$0xff]
    %v439 = vld [vmem:[#allocation5 + $0xb00] sm:$0xff]
    %v440 = vld [vmem:[#allocation5 + $0xb08] sm:$0xff]
    %v441 = vld [vmem:[#allocation5 + $0xb10] sm:$0xff]
    %v442 = vld [vmem:[#allocation5 + $0xb18] sm:$0xff]
    %v443 = vld [vmem:[#allocation5 + $0xb20] sm:$0xff]
    %v444 = vld [vmem:[#allocation5 + $0xb28] sm:$0xff]
    %v445 = vld [vmem:[#allocation5 + $0xb30] sm:$0xff]
    %v446 = vld [vmem:[#allocation5 + $0xb38] sm:$0xff]
    %v447 = vld [vmem:[#allocation5 + $0xb40] sm:$0xff]
    %v448 = vld [vmem:[#allocation5 + $0xb48] sm:$0xff]
    %v449 = vld [vmem:[#allocation5 + $0xb50] sm:$0xff]
    %v450 = vld [vmem:[#allocation5 + $0xb58] sm:$0xff]
    %v451 = vld [vmem:[#allocation5 + $0xb60] sm:$0xff]
    %v452 = vld [vmem:[#allocation5 + $0xb68] sm:$0xff]
    %v453 = vld [vmem:[#allocation5 + $0xb70] sm:$0xff]
    %v454 = vld [vmem:[#allocation5 + $0xb78] sm:$0xff]
    %v455 = vld [vmem:[#allocation5 + $0xb80] sm:$0xff]
    %v456 = vld [vmem:[#allocation5 + $0xb88] sm:$0xff]
    %v457 = vld [vmem:[#allocation5 + $0xb90] sm:$0xff]
    %v458 = vld [vmem:[#allocation5 + $0xb98] sm:$0xff]
    %v459 = vld [vmem:[#allocation5 + $0xba0] sm:$0xff]
    %v460 = vld [vmem:[#allocation5 + $0xba8] sm:$0xff]
    %v461 = vld [vmem:[#allocation5 + $0xbb0] sm:$0xff]
    %v462 = vld [vmem:[#allocation5 + $0xbb8] sm:$0xff]
    %v463 = vld [vmem:[#allocation5 + $0xbc0] sm:$0xff]
    %v464 = vld [vmem:[#allocation5 + $0xbc8] sm:$0xff]
    %v465 = vld [vmem:[#allocation5 + $0xbd0] sm:$0xff]
    %v466 = vld [vmem:[#allocation5 + $0xbd8] sm:$0xff]
    %v467 = vld [vmem:[#allocation5 + $0xbe0] sm:$0xff]
    %v468 = vld [vmem:[#allocation5 + $0xbe8] sm:$0xff]
    %v469 = vld [vmem:[#allocation5 + $0xbf0] sm:$0xff]
    %v470 = vld [vmem:[#allocation5 + $0xbf8] sm:$0xff]
    %v471 = vld [vmem:[#allocation7] sm:$0xff]
    %v473 = vperm.slane %v471, 0
    %v474 = vperm.slane %v471, 1
    %v475 = vperm.slane %v471, 2
    %v476 = vperm.slane %v471, 3
    %v477 = vperm.slane %v471, 4
    %v478 = vperm.slane %v471, 5
    %v479 = vperm.slane %v471, 6
    %v480 = vperm.slane %v471, 7
    %v495 = vunpack.c.l.b16 %v81
    %v496 = vunpack.c.h.b16 %v81
    %v497 = vunpack.c.l.b16 %v82
    %v498 = vunpack.c.h.b16 %v82
    %v499 = vunpack.c.l.b16 %v83
    %v500 = vunpack.c.h.b16 %v83
    %v501 = vunpack.c.l.b16 %v84
    %v502 = vunpack.c.h.b16 %v84
    %v503 = vunpack.c.l.b16 %v85
    %v504 = vunpack.c.h.b16 %v85
    %v505 = vunpack.c.l.b16 %v86
    %v506 = vunpack.c.h.b16 %v86
    %v507 = vpack.c.b16 %v501, %v495
    %v508 = vpack.c.b16 %v502, %v496
    %v509 = vpack.c.b16 %v503, %v497
    %v510 = vpack.c.b16 %v504, %v498
    %v511 = vpack.c.b16 %v505, %v499
    %v512 = vpack.c.b16 %v506, %v500
    %v903 = vunpack.c.l.b16 %v87
    %v904 = vunpack.c.h.b16 %v87
    %v905 = vunpack.c.l.b16 %v88
    %v906 = vunpack.c.h.b16 %v88
    %v907 = vunpack.c.l.b16 %v89
    %v908 = vunpack.c.h.b16 %v89
    %v909 = vunpack.c.l.b16 %v90
    %v910 = vunpack.c.h.b16 %v90
    %v911 = vunpack.c.l.b16 %v91
    %v912 = vunpack.c.h.b16 %v91
    %v913 = vunpack.c.l.b16 %v92
    %v914 = vunpack.c.h.b16 %v92
    %v915 = vunpack.c.l.b16 %v93
    %v916 = vunpack.c.h.b16 %v93
    %v917 = vunpack.c.l.b16 %v94
    %v918 = vunpack.c.h.b16 %v94
    %v919 = vunpack.c.l.b16 %v95
    %v920 = vunpack.c.h.b16 %v95
    %v921 = vunpack.c.l.b16 %v96
    %v922 = vunpack.c.h.b16 %v96
    %v923 = vunpack.c.l.b16 %v97
    %v924 = vunpack.c.h.b16 %v97
    %v925 = vunpack.c.l.b16 %v98
    %v926 = vunpack.c.h.b16 %v98
    %v927 = vunpack.c.l.b16 %v99
    %v928 = vunpack.c.h.b16 %v99
    %v929 = vunpack.c.l.b16 %v100
    %v930 = vunpack.c.h.b16 %v100
    %v931 = vunpack.c.l.b16 %v101
    %v932 = vunpack.c.h.b16 %v101
    %v933 = vunpack.c.l.b16 %v102
    %v934 = vunpack.c.h.b16 %v102
    %v935 = vunpack.c.l.b16 %v103
    %v936 = vunpack.c.h.b16 %v103
    %v937 = vunpack.c.l.b16 %v104
    %v938 = vunpack.c.h.b16 %v104
    %v939 = vunpack.c.l.b16 %v105
    %v940 = vunpack.c.h.b16 %v105
    %v941 = vunpack.c.l.b16 %v106
    %v942 = vunpack.c.h.b16 %v106
    %v943 = vunpack.c.l.b16 %v107
    %v944 = vunpack.c.h.b16 %v107
    %v945 = vunpack.c.l.b16 %v108
    %v946 = vunpack.c.h.b16 %v108
    %v947 = vunpack.c.l.b16 %v109
    %v948 = vunpack.c.h.b16 %v109
    %v949 = vunpack.c.l.b16 %v110
    %v950 = vunpack.c.h.b16 %v110
    %v951 = vunpack.c.l.b16 %v111
    %v952 = vunpack.c.h.b16 %v111
    %v953 = vunpack.c.l.b16 %v112
    %v954 = vunpack.c.h.b16 %v112
    %v955 = vunpack.c.l.b16 %v113
    %v956 = vunpack.c.h.b16 %v113
    %v957 = vunpack.c.l.b16 %v114
    %v958 = vunpack.c.h.b16 %v114
    %v959 = vunpack.c.l.b16 %v115
    %v960 = vunpack.c.h.b16 %v115
    %v961 = vunpack.c.l.b16 %v116
    %v962 = vunpack.c.h.b16 %v116
    %v963 = vunpack.c.l.b16 %v117
    %v964 = vunpack.c.h.b16 %v117
    %v965 = vunpack.c.l.b16 %v118
    %v966 = vunpack.c.h.b16 %v118
    %v967 = vunpack.c.l.b16 %v119
    %v968 = vunpack.c.h.b16 %v119
    %v969 = vunpack.c.l.b16 %v120
    %v970 = vunpack.c.h.b16 %v120
    %v971 = vunpack.c.l.b16 %v121
    %v972 = vunpack.c.h.b16 %v121
    %v973 = vunpack.c.l.b16 %v122
    %v974 = vunpack.c.h.b16 %v122
    %v975 = vunpack.c.l.b16 %v123
    %v976 = vunpack.c.h.b16 %v123
    %v977 = vunpack.c.l.b16 %v124
    %v978 = vunpack.c.h.b16 %v124
    %v979 = vunpack.c.l.b16 %v125
    %v980 = vunpack.c.h.b16 %v125
    %v981 = vunpack.c.l.b16 %v126
    %v982 = vunpack.c.h.b16 %v126
    %v983 = vunpack.c.l.b16 %v127
    %v984 = vunpack.c.h.b16 %v127
    %v985 = vunpack.c.l.b16 %v128
    %v986 = vunpack.c.h.b16 %v128
    %v987 = vunpack.c.l.b16 %v129
    %v988 = vunpack.c.h.b16 %v129
    %v989 = vunpack.c.l.b16 %v130
    %v990 = vunpack.c.h.b16 %v130
    %v991 = vunpack.c.l.b16 %v131
    %v992 = vunpack.c.h.b16 %v131
    %v993 = vunpack.c.l.b16 %v132
    %v994 = vunpack.c.h.b16 %v132
    %v995 = vunpack.c.l.b16 %v133
    %v996 = vunpack.c.h.b16 %v133
    %v997 = vunpack.c.l.b16 %v134
    %v998 = vunpack.c.h.b16 %v134
    %v999 = vunpack.c.l.b16 %v135
    %v1000 = vunpack.c.h.b16 %v135
    %v1001 = vunpack.c.l.b16 %v136
    %v1002 = vunpack.c.h.b16 %v136
    %v1003 = vunpack.c.l.b16 %v137
    %v1004 = vunpack.c.h.b16 %v137
    %v1005 = vunpack.c.l.b16 %v138
    %v1006 = vunpack.c.h.b16 %v138
    %v1007 = vunpack.c.l.b16 %v139
    %v1008 = vunpack.c.h.b16 %v139
    %v1009 = vunpack.c.l.b16 %v140
    %v1010 = vunpack.c.h.b16 %v140
    %v1011 = vunpack.c.l.b16 %v141
    %v1012 = vunpack.c.h.b16 %v141
    %v1013 = vunpack.c.l.b16 %v142
    %v1014 = vunpack.c.h.b16 %v142
    %v1015 = vunpack.c.l.b16 %v143
    %v1016 = vunpack.c.h.b16 %v143
    %v1017 = vunpack.c.l.b16 %v144
    %v1018 = vunpack.c.h.b16 %v144
    %v1019 = vunpack.c.l.b16 %v145
    %v1020 = vunpack.c.h.b16 %v145
    %v1021 = vunpack.c.l.b16 %v146
    %v1022 = vunpack.c.h.b16 %v146
    %v1023 = vunpack.c.l.b16 %v147
    %v1024 = vunpack.c.h.b16 %v147
    %v1025 = vunpack.c.l.b16 %v148
    %v1026 = vunpack.c.h.b16 %v148
    %v1027 = vunpack.c.l.b16 %v149
    %v1028 = vunpack.c.h.b16 %v149
    %v1029 = vunpack.c.l.b16 %v150
    %v1030 = vunpack.c.h.b16 %v150
    %v1031 = vunpack.c.l.b16 %v151
    %v1032 = vunpack.c.h.b16 %v151
    %v1033 = vunpack.c.l.b16 %v152
    %v1034 = vunpack.c.h.b16 %v152
    %v1035 = vunpack.c.l.b16 %v153
    %v1036 = vunpack.c.h.b16 %v153
    %v1037 = vunpack.c.l.b16 %v154
    %v1038 = vunpack.c.h.b16 %v154
    %v1039 = vunpack.c.l.b16 %v155
    %v1040 = vunpack.c.h.b16 %v155
    %v1041 = vunpack.c.l.b16 %v156
    %v1042 = vunpack.c.h.b16 %v156
    %v1043 = vunpack.c.l.b16 %v157
    %v1044 = vunpack.c.h.b16 %v157
    %v1045 = vunpack.c.l.b16 %v158
    %v1046 = vunpack.c.h.b16 %v158
    %v1047 = vunpack.c.l.b16 %v159
    %v1048 = vunpack.c.h.b16 %v159
    %v1049 = vunpack.c.l.b16 %v160
    %v1050 = vunpack.c.h.b16 %v160
    %v1051 = vunpack.c.l.b16 %v161
    %v1052 = vunpack.c.h.b16 %v161
    %v1053 = vunpack.c.l.b16 %v162
    %v1054 = vunpack.c.h.b16 %v162
    %v1055 = vunpack.c.l.b16 %v163
    %v1056 = vunpack.c.h.b16 %v163
    %v1057 = vunpack.c.l.b16 %v164
    %v1058 = vunpack.c.h.b16 %v164
    %v1059 = vunpack.c.l.b16 %v165
    %v1060 = vunpack.c.h.b16 %v165
    %v1061 = vunpack.c.l.b16 %v166
    %v1062 = vunpack.c.h.b16 %v166
    %v1063 = vunpack.c.l.b16 %v167
    %v1064 = vunpack.c.h.b16 %v167
    %v1065 = vunpack.c.l.b16 %v168
    %v1066 = vunpack.c.h.b16 %v168
    %v1067 = vunpack.c.l.b16 %v169
    %v1068 = vunpack.c.h.b16 %v169
    %v1069 = vunpack.c.l.b16 %v170
    %v1070 = vunpack.c.h.b16 %v170
    %v1071 = vunpack.c.l.b16 %v171
    %v1072 = vunpack.c.h.b16 %v171
    %v1073 = vunpack.c.l.b16 %v172
    %v1074 = vunpack.c.h.b16 %v172
    %v1075 = vunpack.c.l.b16 %v173
    %v1076 = vunpack.c.h.b16 %v173
    %v1077 = vunpack.c.l.b16 %v174
    %v1078 = vunpack.c.h.b16 %v174
    %v1079 = vunpack.c.l.b16 %v175
    %v1080 = vunpack.c.h.b16 %v175
    %v1081 = vunpack.c.l.b16 %v176
    %v1082 = vunpack.c.h.b16 %v176
    %v1083 = vunpack.c.l.b16 %v177
    %v1084 = vunpack.c.h.b16 %v177
    %v1085 = vunpack.c.l.b16 %v178
    %v1086 = vunpack.c.h.b16 %v178
    %v1087 = vunpack.c.l.b16 %v179
    %v1088 = vunpack.c.h.b16 %v179
    %v1089 = vunpack.c.l.b16 %v180
    %v1090 = vunpack.c.h.b16 %v180
    %v1091 = vunpack.c.l.b16 %v181
    %v1092 = vunpack.c.h.b16 %v181
    %v1093 = vunpack.c.l.b16 %v182
    %v1094 = vunpack.c.h.b16 %v182
    %v1095 = vunpack.c.l.b16 %v183
    %v1096 = vunpack.c.h.b16 %v183
    %v1097 = vunpack.c.l.b16 %v184
    %v1098 = vunpack.c.h.b16 %v184
    %v1099 = vunpack.c.l.b16 %v185
    %v1100 = vunpack.c.h.b16 %v185
    %v1101 = vunpack.c.l.b16 %v186
    %v1102 = vunpack.c.h.b16 %v186
    %v1103 = vunpack.c.l.b16 %v187
    %v1104 = vunpack.c.h.b16 %v187
    %v1105 = vunpack.c.l.b16 %v188
    %v1106 = vunpack.c.h.b16 %v188
    %v1107 = vunpack.c.l.b16 %v189
    %v1108 = vunpack.c.h.b16 %v189
    %v1109 = vunpack.c.l.b16 %v190
    %v1110 = vunpack.c.h.b16 %v190
    %v1111 = vunpack.c.l.b16 %v191
    %v1112 = vunpack.c.h.b16 %v191
    %v1113 = vunpack.c.l.b16 %v192
    %v1114 = vunpack.c.h.b16 %v192
    %v1115 = vunpack.c.l.b16 %v193
    %v1116 = vunpack.c.h.b16 %v193
    %v1117 = vunpack.c.l.b16 %v194
    %v1118 = vunpack.c.h.b16 %v194
    %v1119 = vunpack.c.l.b16 %v195
    %v1120 = vunpack.c.h.b16 %v195
    %v1121 = vunpack.c.l.b16 %v196
    %v1122 = vunpack.c.h.b16 %v196
    %v1123 = vunpack.c.l.b16 %v197
    %v1124 = vunpack.c.h.b16 %v197
    %v1125 = vunpack.c.l.b16 %v198
    %v1126 = vunpack.c.h.b16 %v198
    %v1127 = vunpack.c.l.b16 %v199
    %v1128 = vunpack.c.h.b16 %v199
    %v1129 = vunpack.c.l.b16 %v200
    %v1130 = vunpack.c.h.b16 %v200
    %v1131 = vunpack.c.l.b16 %v201
    %v1132 = vunpack.c.h.b16 %v201
    %v1133 = vunpack.c.l.b16 %v202
    %v1134 = vunpack.c.h.b16 %v202
    %v1135 = vunpack.c.l.b16 %v203
    %v1136 = vunpack.c.h.b16 %v203
    %v1137 = vunpack.c.l.b16 %v204
    %v1138 = vunpack.c.h.b16 %v204
    %v1139 = vunpack.c.l.b16 %v205
    %v1140 = vunpack.c.h.b16 %v205
    %v1141 = vunpack.c.l.b16 %v206
    %v1142 = vunpack.c.h.b16 %v206
    %v1143 = vunpack.c.l.b16 %v207
    %v1144 = vunpack.c.h.b16 %v207
    %v1145 = vunpack.c.l.b16 %v208
    %v1146 = vunpack.c.h.b16 %v208
    %v1147 = vunpack.c.l.b16 %v209
    %v1148 = vunpack.c.h.b16 %v209
    %v1149 = vunpack.c.l.b16 %v210
    %v1150 = vunpack.c.h.b16 %v210
    %v1151 = vunpack.c.l.b16 %v211
    %v1152 = vunpack.c.h.b16 %v211
    %v1153 = vunpack.c.l.b16 %v212
    %v1154 = vunpack.c.h.b16 %v212
    %v1155 = vunpack.c.l.b16 %v213
    %v1156 = vunpack.c.h.b16 %v213
    %v1157 = vunpack.c.l.b16 %v214
    %v1158 = vunpack.c.h.b16 %v214
    %v1159 = vunpack.c.l.b16 %v215
    %v1160 = vunpack.c.h.b16 %v215
    %v1161 = vunpack.c.l.b16 %v216
    %v1162 = vunpack.c.h.b16 %v216
    %v1163 = vunpack.c.l.b16 %v217
    %v1164 = vunpack.c.h.b16 %v217
    %v1165 = vunpack.c.l.b16 %v218
    %v1166 = vunpack.c.h.b16 %v218
    %v1167 = vunpack.c.l.b16 %v219
    %v1168 = vunpack.c.h.b16 %v219
    %v1169 = vunpack.c.l.b16 %v220
    %v1170 = vunpack.c.h.b16 %v220
    %v1171 = vunpack.c.l.b16 %v221
    %v1172 = vunpack.c.h.b16 %v221
    %v1173 = vunpack.c.l.b16 %v222
    %v1174 = vunpack.c.h.b16 %v222
    %v1175 = vunpack.c.l.b16 %v223
    %v1176 = vunpack.c.h.b16 %v223
    %v1177 = vunpack.c.l.b16 %v224
    %v1178 = vunpack.c.h.b16 %v224
    %v1179 = vunpack.c.l.b16 %v225
    %v1180 = vunpack.c.h.b16 %v225
    %v1181 = vunpack.c.l.b16 %v226
    %v1182 = vunpack.c.h.b16 %v226
    %v1183 = vunpack.c.l.b16 %v227
    %v1184 = vunpack.c.h.b16 %v227
    %v1185 = vunpack.c.l.b16 %v228
    %v1186 = vunpack.c.h.b16 %v228
    %v1187 = vunpack.c.l.b16 %v229
    %v1188 = vunpack.c.h.b16 %v229
    %v1189 = vunpack.c.l.b16 %v230
    %v1190 = vunpack.c.h.b16 %v230
    %v1191 = vunpack.c.l.b16 %v231
    %v1192 = vunpack.c.h.b16 %v231
    %v1193 = vunpack.c.l.b16 %v232
    %v1194 = vunpack.c.h.b16 %v232
    %v1195 = vunpack.c.l.b16 %v233
    %v1196 = vunpack.c.h.b16 %v233
    %v1197 = vunpack.c.l.b16 %v234
    %v1198 = vunpack.c.h.b16 %v234
    %v1199 = vunpack.c.l.b16 %v235
    %v1200 = vunpack.c.h.b16 %v235
    %v1201 = vunpack.c.l.b16 %v236
    %v1202 = vunpack.c.h.b16 %v236
    %v1203 = vunpack.c.l.b16 %v237
    %v1204 = vunpack.c.h.b16 %v237
    %v1205 = vunpack.c.l.b16 %v238
    %v1206 = vunpack.c.h.b16 %v238
    %v1207 = vunpack.c.l.b16 %v239
    %v1208 = vunpack.c.h.b16 %v239
    %v1209 = vunpack.c.l.b16 %v240
    %v1210 = vunpack.c.h.b16 %v240
    %v1211 = vunpack.c.l.b16 %v241
    %v1212 = vunpack.c.h.b16 %v241
    %v1213 = vunpack.c.l.b16 %v242
    %v1214 = vunpack.c.h.b16 %v242
    %v1215 = vunpack.c.l.b16 %v243
    %v1216 = vunpack.c.h.b16 %v243
    %v1217 = vunpack.c.l.b16 %v244
    %v1218 = vunpack.c.h.b16 %v244
    %v1219 = vunpack.c.l.b16 %v245
    %v1220 = vunpack.c.h.b16 %v245
    %v1221 = vunpack.c.l.b16 %v246
    %v1222 = vunpack.c.h.b16 %v246
    %v1223 = vunpack.c.l.b16 %v247
    %v1224 = vunpack.c.h.b16 %v247
    %v1225 = vunpack.c.l.b16 %v248
    %v1226 = vunpack.c.h.b16 %v248
    %v1227 = vunpack.c.l.b16 %v249
    %v1228 = vunpack.c.h.b16 %v249
    %v1229 = vunpack.c.l.b16 %v250
    %v1230 = vunpack.c.h.b16 %v250
    %v1231 = vunpack.c.l.b16 %v251
    %v1232 = vunpack.c.h.b16 %v251
    %v1233 = vunpack.c.l.b16 %v252
    %v1234 = vunpack.c.h.b16 %v252
    %v1235 = vunpack.c.l.b16 %v253
    %v1236 = vunpack.c.h.b16 %v253
    %v1237 = vunpack.c.l.b16 %v254
    %v1238 = vunpack.c.h.b16 %v254
    %v1239 = vunpack.c.l.b16 %v255
    %v1240 = vunpack.c.h.b16 %v255
    %v1241 = vunpack.c.l.b16 %v256
    %v1242 = vunpack.c.h.b16 %v256
    %v1243 = vunpack.c.l.b16 %v257
    %v1244 = vunpack.c.h.b16 %v257
    %v1245 = vunpack.c.l.b16 %v258
    %v1246 = vunpack.c.h.b16 %v258
    %v1247 = vunpack.c.l.b16 %v259
    %v1248 = vunpack.c.h.b16 %v259
    %v1249 = vunpack.c.l.b16 %v260
    %v1250 = vunpack.c.h.b16 %v260
    %v1251 = vunpack.c.l.b16 %v261
    %v1252 = vunpack.c.h.b16 %v261
    %v1253 = vunpack.c.l.b16 %v262
    %v1254 = vunpack.c.h.b16 %v262
    %v1255 = vunpack.c.l.b16 %v263
    %v1256 = vunpack.c.h.b16 %v263
    %v1257 = vunpack.c.l.b16 %v264
    %v1258 = vunpack.c.h.b16 %v264
    %v1259 = vunpack.c.l.b16 %v265
    %v1260 = vunpack.c.h.b16 %v265
    %v1261 = vunpack.c.l.b16 %v266
    %v1262 = vunpack.c.h.b16 %v266
    %v1263 = vunpack.c.l.b16 %v267
    %v1264 = vunpack.c.h.b16 %v267
    %v1265 = vunpack.c.l.b16 %v268
    %v1266 = vunpack.c.h.b16 %v268
    %v1267 = vunpack.c.l.b16 %v269
    %v1268 = vunpack.c.h.b16 %v269
    %v1269 = vunpack.c.l.b16 %v270
    %v1270 = vunpack.c.h.b16 %v270
    %v1271 = vunpack.c.l.b16 %v271
    %v1272 = vunpack.c.h.b16 %v271
    %v1273 = vunpack.c.l.b16 %v272
    %v1274 = vunpack.c.h.b16 %v272
    %v1275 = vunpack.c.l.b16 %v273
    %v1276 = vunpack.c.h.b16 %v273
    %v1277 = vunpack.c.l.b16 %v274
    %v1278 = vunpack.c.h.b16 %v274
    %v1279 = vunpack.c.l.b16 %v275
    %v1280 = vunpack.c.h.b16 %v275
    %v1281 = vunpack.c.l.b16 %v276
    %v1282 = vunpack.c.h.b16 %v276
    %v1283 = vunpack.c.l.b16 %v277
    %v1284 = vunpack.c.h.b16 %v277
    %v1285 = vunpack.c.l.b16 %v278
    %v1286 = vunpack.c.h.b16 %v278
    %v1287 = vunpack.c.l.b16 %v279
    %v1288 = vunpack.c.h.b16 %v279
    %v1289 = vunpack.c.l.b16 %v280
    %v1290 = vunpack.c.h.b16 %v280
    %v1291 = vunpack.c.l.b16 %v281
    %v1292 = vunpack.c.h.b16 %v281
    %v1293 = vunpack.c.l.b16 %v282
    %v1294 = vunpack.c.h.b16 %v282
    %v1295 = vunpack.c.l.b16 %v283
    %v1296 = vunpack.c.h.b16 %v283
    %v1297 = vunpack.c.l.b16 %v284
    %v1298 = vunpack.c.h.b16 %v284
    %v1299 = vunpack.c.l.b16 %v285
    %v1300 = vunpack.c.h.b16 %v285
    %v1301 = vunpack.c.l.b16 %v286
    %v1302 = vunpack.c.h.b16 %v286
    %v1303 = vunpack.c.l.b16 %v287
    %v1304 = vunpack.c.h.b16 %v287
    %v1305 = vunpack.c.l.b16 %v288
    %v1306 = vunpack.c.h.b16 %v288
    %v1307 = vunpack.c.l.b16 %v289
    %v1308 = vunpack.c.h.b16 %v289
    %v1309 = vunpack.c.l.b16 %v290
    %v1310 = vunpack.c.h.b16 %v290
    %v1311 = vunpack.c.l.b16 %v291
    %v1312 = vunpack.c.h.b16 %v291
    %v1313 = vunpack.c.l.b16 %v292
    %v1314 = vunpack.c.h.b16 %v292
    %v1315 = vunpack.c.l.b16 %v293
    %v1316 = vunpack.c.h.b16 %v293
    %v1317 = vunpack.c.l.b16 %v294
    %v1318 = vunpack.c.h.b16 %v294
    %v1319 = vunpack.c.l.b16 %v295
    %v1320 = vunpack.c.h.b16 %v295
    %v1321 = vunpack.c.l.b16 %v296
    %v1322 = vunpack.c.h.b16 %v296
    %v1323 = vunpack.c.l.b16 %v297
    %v1324 = vunpack.c.h.b16 %v297
    %v1325 = vunpack.c.l.b16 %v298
    %v1326 = vunpack.c.h.b16 %v298
    %v1327 = vunpack.c.l.b16 %v299
    %v1328 = vunpack.c.h.b16 %v299
    %v1329 = vunpack.c.l.b16 %v300
    %v1330 = vunpack.c.h.b16 %v300
    %v1331 = vunpack.c.l.b16 %v301
    %v1332 = vunpack.c.h.b16 %v301
    %v1333 = vunpack.c.l.b16 %v302
    %v1334 = vunpack.c.h.b16 %v302
    %v1335 = vunpack.c.l.b16 %v303
    %v1336 = vunpack.c.h.b16 %v303
    %v1337 = vunpack.c.l.b16 %v304
    %v1338 = vunpack.c.h.b16 %v304
    %v1339 = vunpack.c.l.b16 %v305
    %v1340 = vunpack.c.h.b16 %v305
    %v1341 = vunpack.c.l.b16 %v306
    %v1342 = vunpack.c.h.b16 %v306
    %v1343 = vunpack.c.l.b16 %v307
    %v1344 = vunpack.c.h.b16 %v307
    %v1345 = vunpack.c.l.b16 %v308
    %v1346 = vunpack.c.h.b16 %v308
    %v1347 = vunpack.c.l.b16 %v309
    %v1348 = vunpack.c.h.b16 %v309
    %v1349 = vunpack.c.l.b16 %v310
    %v1350 = vunpack.c.h.b16 %v310
    %v1351 = vunpack.c.l.b16 %v311
    %v1352 = vunpack.c.h.b16 %v311
    %v1353 = vunpack.c.l.b16 %v312
    %v1354 = vunpack.c.h.b16 %v312
    %v1355 = vunpack.c.l.b16 %v313
    %v1356 = vunpack.c.h.b16 %v313
    %v1357 = vunpack.c.l.b16 %v314
    %v1358 = vunpack.c.h.b16 %v314
    %v1359 = vunpack.c.l.b16 %v315
    %v1360 = vunpack.c.h.b16 %v315
    %v1361 = vunpack.c.l.b16 %v316
    %v1362 = vunpack.c.h.b16 %v316
    %v1363 = vunpack.c.l.b16 %v317
    %v1364 = vunpack.c.h.b16 %v317
    %v1365 = vunpack.c.l.b16 %v318
    %v1366 = vunpack.c.h.b16 %v318
    %v1367 = vunpack.c.l.b16 %v319
    %v1368 = vunpack.c.h.b16 %v319
    %v1369 = vunpack.c.l.b16 %v320
    %v1370 = vunpack.c.h.b16 %v320
    %v1371 = vunpack.c.l.b16 %v321
    %v1372 = vunpack.c.h.b16 %v321
    %v1373 = vunpack.c.l.b16 %v322
    %v1374 = vunpack.c.h.b16 %v322
    %v1375 = vunpack.c.l.b16 %v323
    %v1376 = vunpack.c.h.b16 %v323
    %v1377 = vunpack.c.l.b16 %v324
    %v1378 = vunpack.c.h.b16 %v324
    %v1379 = vunpack.c.l.b16 %v325
    %v1380 = vunpack.c.h.b16 %v325
    %v1381 = vunpack.c.l.b16 %v326
    %v1382 = vunpack.c.h.b16 %v326
    %v1383 = vunpack.c.l.b16 %v327
    %v1384 = vunpack.c.h.b16 %v327
    %v1385 = vunpack.c.l.b16 %v328
    %v1386 = vunpack.c.h.b16 %v328
    %v1387 = vunpack.c.l.b16 %v329
    %v1388 = vunpack.c.h.b16 %v329
    %v1389 = vunpack.c.l.b16 %v330
    %v1390 = vunpack.c.h.b16 %v330
    %v1391 = vunpack.c.l.b16 %v331
    %v1392 = vunpack.c.h.b16 %v331
    %v1393 = vunpack.c.l.b16 %v332
    %v1394 = vunpack.c.h.b16 %v332
    %v1395 = vunpack.c.l.b16 %v333
    %v1396 = vunpack.c.h.b16 %v333
    %v1397 = vunpack.c.l.b16 %v334
    %v1398 = vunpack.c.h.b16 %v334
    %v1399 = vunpack.c.l.b16 %v335
    %v1400 = vunpack.c.h.b16 %v335
    %v1401 = vunpack.c.l.b16 %v336
    %v1402 = vunpack.c.h.b16 %v336
    %v1403 = vunpack.c.l.b16 %v337
    %v1404 = vunpack.c.h.b16 %v337
    %v1405 = vunpack.c.l.b16 %v338
    %v1406 = vunpack.c.h.b16 %v338
    %v1407 = vunpack.c.l.b16 %v339
    %v1408 = vunpack.c.h.b16 %v339
    %v1409 = vunpack.c.l.b16 %v340
    %v1410 = vunpack.c.h.b16 %v340
    %v1411 = vunpack.c.l.b16 %v341
    %v1412 = vunpack.c.h.b16 %v341
    %v1413 = vunpack.c.l.b16 %v342
    %v1414 = vunpack.c.h.b16 %v342
    %v1415 = vunpack.c.l.b16 %v343
    %v1416 = vunpack.c.h.b16 %v343
    %v1417 = vunpack.c.l.b16 %v344
    %v1418 = vunpack.c.h.b16 %v344
    %v1419 = vunpack.c.l.b16 %v345
    %v1420 = vunpack.c.h.b16 %v345
    %v1421 = vunpack.c.l.b16 %v346
    %v1422 = vunpack.c.h.b16 %v346
    %v1423 = vunpack.c.l.b16 %v347
    %v1424 = vunpack.c.h.b16 %v347
    %v1425 = vunpack.c.l.b16 %v348
    %v1426 = vunpack.c.h.b16 %v348
    %v1427 = vunpack.c.l.b16 %v349
    %v1428 = vunpack.c.h.b16 %v349
    %v1429 = vunpack.c.l.b16 %v350
    %v1430 = vunpack.c.h.b16 %v350
    %v1431 = vunpack.c.l.b16 %v351
    %v1432 = vunpack.c.h.b16 %v351
    %v1433 = vunpack.c.l.b16 %v352
    %v1434 = vunpack.c.h.b16 %v352
    %v1435 = vunpack.c.l.b16 %v353
    %v1436 = vunpack.c.h.b16 %v353
    %v1437 = vunpack.c.l.b16 %v354
    %v1438 = vunpack.c.h.b16 %v354
    %v1439 = vunpack.c.l.b16 %v355
    %v1440 = vunpack.c.h.b16 %v355
    %v1441 = vunpack.c.l.b16 %v356
    %v1442 = vunpack.c.h.b16 %v356
    %v1443 = vunpack.c.l.b16 %v357
    %v1444 = vunpack.c.h.b16 %v357
    %v1445 = vunpack.c.l.b16 %v358
    %v1446 = vunpack.c.h.b16 %v358
    %v1447 = vunpack.c.l.b16 %v359
    %v1448 = vunpack.c.h.b16 %v359
    %v1449 = vunpack.c.l.b16 %v360
    %v1450 = vunpack.c.h.b16 %v360
    %v1451 = vunpack.c.l.b16 %v361
    %v1452 = vunpack.c.h.b16 %v361
    %v1453 = vunpack.c.l.b16 %v362
    %v1454 = vunpack.c.h.b16 %v362
    %v1455 = vunpack.c.l.b16 %v363
    %v1456 = vunpack.c.h.b16 %v363
    %v1457 = vunpack.c.l.b16 %v364
    %v1458 = vunpack.c.h.b16 %v364
    %v1459 = vunpack.c.l.b16 %v365
    %v1460 = vunpack.c.h.b16 %v365
    %v1461 = vunpack.c.l.b16 %v366
    %v1462 = vunpack.c.h.b16 %v366
    %v1463 = vunpack.c.l.b16 %v367
    %v1464 = vunpack.c.h.b16 %v367
    %v1465 = vunpack.c.l.b16 %v368
    %v1466 = vunpack.c.h.b16 %v368
    %v1467 = vunpack.c.l.b16 %v369
    %v1468 = vunpack.c.h.b16 %v369
    %v1469 = vunpack.c.l.b16 %v370
    %v1470 = vunpack.c.h.b16 %v370
    %v1471 = vunpack.c.l.b16 %v371
    %v1472 = vunpack.c.h.b16 %v371
    %v1473 = vunpack.c.l.b16 %v372
    %v1474 = vunpack.c.h.b16 %v372
    %v1475 = vunpack.c.l.b16 %v373
    %v1476 = vunpack.c.h.b16 %v373
    %v1477 = vunpack.c.l.b16 %v374
    %v1478 = vunpack.c.h.b16 %v374
    %v1479 = vunpack.c.l.b16 %v375
    %v1480 = vunpack.c.h.b16 %v375
    %v1481 = vunpack.c.l.b16 %v376
    %v1482 = vunpack.c.h.b16 %v376
    %v1483 = vunpack.c.l.b16 %v377
    %v1484 = vunpack.c.h.b16 %v377
    %v1485 = vunpack.c.l.b16 %v378
    %v1486 = vunpack.c.h.b16 %v378
    %v1487 = vunpack.c.l.b16 %v379
    %v1488 = vunpack.c.h.b16 %v379
    %v1489 = vunpack.c.l.b16 %v380
    %v1490 = vunpack.c.h.b16 %v380
    %v1491 = vunpack.c.l.b16 %v381
    %v1492 = vunpack.c.h.b16 %v381
    %v1493 = vunpack.c.l.b16 %v382
    %v1494 = vunpack.c.h.b16 %v382
    %v1495 = vunpack.c.l.b16 %v383
    %v1496 = vunpack.c.h.b16 %v383
    %v1497 = vunpack.c.l.b16 %v384
    %v1498 = vunpack.c.h.b16 %v384
    %v1499 = vunpack.c.l.b16 %v385
    %v1500 = vunpack.c.h.b16 %v385
    %v1501 = vunpack.c.l.b16 %v386
    %v1502 = vunpack.c.h.b16 %v386
    %v1503 = vunpack.c.l.b16 %v387
    %v1504 = vunpack.c.h.b16 %v387
    %v1505 = vunpack.c.l.b16 %v388
    %v1506 = vunpack.c.h.b16 %v388
    %v1507 = vunpack.c.l.b16 %v389
    %v1508 = vunpack.c.h.b16 %v389
    %v1509 = vunpack.c.l.b16 %v390
    %v1510 = vunpack.c.h.b16 %v390
    %v1511 = vunpack.c.l.b16 %v391
    %v1512 = vunpack.c.h.b16 %v391
    %v1513 = vunpack.c.l.b16 %v392
    %v1514 = vunpack.c.h.b16 %v392
    %v1515 = vunpack.c.l.b16 %v393
    %v1516 = vunpack.c.h.b16 %v393
    %v1517 = vunpack.c.l.b16 %v394
    %v1518 = vunpack.c.h.b16 %v394
    %v1519 = vunpack.c.l.b16 %v395
    %v1520 = vunpack.c.h.b16 %v395
    %v1521 = vunpack.c.l.b16 %v396
    %v1522 = vunpack.c.h.b16 %v396
    %v1523 = vunpack.c.l.b16 %v397
    %v1524 = vunpack.c.h.b16 %v397
    %v1525 = vunpack.c.l.b16 %v398
    %v1526 = vunpack.c.h.b16 %v398
    %v1527 = vunpack.c.l.b16 %v399
    %v1528 = vunpack.c.h.b16 %v399
    %v1529 = vunpack.c.l.b16 %v400
    %v1530 = vunpack.c.h.b16 %v400
    %v1531 = vunpack.c.l.b16 %v401
    %v1532 = vunpack.c.h.b16 %v401
    %v1533 = vunpack.c.l.b16 %v402
    %v1534 = vunpack.c.h.b16 %v402
    %v1535 = vunpack.c.l.b16 %v403
    %v1536 = vunpack.c.h.b16 %v403
    %v1537 = vunpack.c.l.b16 %v404
    %v1538 = vunpack.c.h.b16 %v404
    %v1539 = vunpack.c.l.b16 %v405
    %v1540 = vunpack.c.h.b16 %v405
    %v1541 = vunpack.c.l.b16 %v406
    %v1542 = vunpack.c.h.b16 %v406
    %v1543 = vunpack.c.l.b16 %v407
    %v1544 = vunpack.c.h.b16 %v407
    %v1545 = vunpack.c.l.b16 %v408
    %v1546 = vunpack.c.h.b16 %v408
    %v1547 = vunpack.c.l.b16 %v409
    %v1548 = vunpack.c.h.b16 %v409
    %v1549 = vunpack.c.l.b16 %v410
    %v1550 = vunpack.c.h.b16 %v410
    %v1551 = vunpack.c.l.b16 %v411
    %v1552 = vunpack.c.h.b16 %v411
    %v1553 = vunpack.c.l.b16 %v412
    %v1554 = vunpack.c.h.b16 %v412
    %v1555 = vunpack.c.l.b16 %v413
    %v1556 = vunpack.c.h.b16 %v413
    %v1557 = vunpack.c.l.b16 %v414
    %v1558 = vunpack.c.h.b16 %v414
    %v1559 = vunpack.c.l.b16 %v415
    %v1560 = vunpack.c.h.b16 %v415
    %v1561 = vunpack.c.l.b16 %v416
    %v1562 = vunpack.c.h.b16 %v416
    %v1563 = vunpack.c.l.b16 %v417
    %v1564 = vunpack.c.h.b16 %v417
    %v1565 = vunpack.c.l.b16 %v418
    %v1566 = vunpack.c.h.b16 %v418
    %v1567 = vunpack.c.l.b16 %v419
    %v1568 = vunpack.c.h.b16 %v419
    %v1569 = vunpack.c.l.b16 %v420
    %v1570 = vunpack.c.h.b16 %v420
    %v1571 = vunpack.c.l.b16 %v421
    %v1572 = vunpack.c.h.b16 %v421
    %v1573 = vunpack.c.l.b16 %v422
    %v1574 = vunpack.c.h.b16 %v422
    %v1575 = vunpack.c.l.b16 %v423
    %v1576 = vunpack.c.h.b16 %v423
    %v1577 = vunpack.c.l.b16 %v424
    %v1578 = vunpack.c.h.b16 %v424
    %v1579 = vunpack.c.l.b16 %v425
    %v1580 = vunpack.c.h.b16 %v425
    %v1581 = vunpack.c.l.b16 %v426
    %v1582 = vunpack.c.h.b16 %v426
    %v1583 = vunpack.c.l.b16 %v427
    %v1584 = vunpack.c.h.b16 %v427
    %v1585 = vunpack.c.l.b16 %v428
    %v1586 = vunpack.c.h.b16 %v428
    %v1587 = vunpack.c.l.b16 %v429
    %v1588 = vunpack.c.h.b16 %v429
    %v1589 = vunpack.c.l.b16 %v430
    %v1590 = vunpack.c.h.b16 %v430
    %v1591 = vunpack.c.l.b16 %v431
    %v1592 = vunpack.c.h.b16 %v431
    %v1593 = vunpack.c.l.b16 %v432
    %v1594 = vunpack.c.h.b16 %v432
    %v1595 = vunpack.c.l.b16 %v433
    %v1596 = vunpack.c.h.b16 %v433
    %v1597 = vunpack.c.l.b16 %v434
    %v1598 = vunpack.c.h.b16 %v434
    %v1599 = vunpack.c.l.b16 %v435
    %v1600 = vunpack.c.h.b16 %v435
    %v1601 = vunpack.c.l.b16 %v436
    %v1602 = vunpack.c.h.b16 %v436
    %v1603 = vunpack.c.l.b16 %v437
    %v1604 = vunpack.c.h.b16 %v437
    %v1605 = vunpack.c.l.b16 %v438
    %v1606 = vunpack.c.h.b16 %v438
    %v1607 = vunpack.c.l.b16 %v439
    %v1608 = vunpack.c.h.b16 %v439
    %v1609 = vunpack.c.l.b16 %v440
    %v1610 = vunpack.c.h.b16 %v440
    %v1611 = vunpack.c.l.b16 %v441
    %v1612 = vunpack.c.h.b16 %v441
    %v1613 = vunpack.c.l.b16 %v442
    %v1614 = vunpack.c.h.b16 %v442
    %v1615 = vunpack.c.l.b16 %v443
    %v1616 = vunpack.c.h.b16 %v443
    %v1617 = vunpack.c.l.b16 %v444
    %v1618 = vunpack.c.h.b16 %v444
    %v1619 = vunpack.c.l.b16 %v445
    %v1620 = vunpack.c.h.b16 %v445
    %v1621 = vunpack.c.l.b16 %v446
    %v1622 = vunpack.c.h.b16 %v446
    %v1623 = vunpack.c.l.b16 %v447
    %v1624 = vunpack.c.h.b16 %v447
    %v1625 = vunpack.c.l.b16 %v448
    %v1626 = vunpack.c.h.b16 %v448
    %v1627 = vunpack.c.l.b16 %v449
    %v1628 = vunpack.c.h.b16 %v449
    %v1629 = vunpack.c.l.b16 %v450
    %v1630 = vunpack.c.h.b16 %v450
    %v1631 = vunpack.c.l.b16 %v451
    %v1632 = vunpack.c.h.b16 %v451
    %v1633 = vunpack.c.l.b16 %v452
    %v1634 = vunpack.c.h.b16 %v452
    %v1635 = vunpack.c.l.b16 %v453
    %v1636 = vunpack.c.h.b16 %v453
    %v1637 = vunpack.c.l.b16 %v454
    %v1638 = vunpack.c.h.b16 %v454
    %v1639 = vunpack.c.l.b16 %v455
    %v1640 = vunpack.c.h.b16 %v455
    %v1641 = vunpack.c.l.b16 %v456
    %v1642 = vunpack.c.h.b16 %v456
    %v1643 = vunpack.c.l.b16 %v457
    %v1644 = vunpack.c.h.b16 %v457
    %v1645 = vunpack.c.l.b16 %v458
    %v1646 = vunpack.c.h.b16 %v458
    %v1647 = vunpack.c.l.b16 %v459
    %v1648 = vunpack.c.h.b16 %v459
    %v1649 = vunpack.c.l.b16 %v460
    %v1650 = vunpack.c.h.b16 %v460
    %v1651 = vunpack.c.l.b16 %v461
    %v1652 = vunpack.c.h.b16 %v461
    %v1653 = vunpack.c.l.b16 %v462
    %v1654 = vunpack.c.h.b16 %v462
    %v1655 = vunpack.c.l.b16 %v463
    %v1656 = vunpack.c.h.b16 %v463
    %v1657 = vunpack.c.l.b16 %v464
    %v1658 = vunpack.c.h.b16 %v464
    %v1659 = vunpack.c.l.b16 %v465
    %v1660 = vunpack.c.h.b16 %v465
    %v1661 = vunpack.c.l.b16 %v466
    %v1662 = vunpack.c.h.b16 %v466
    %v1663 = vunpack.c.l.b16 %v467
    %v1664 = vunpack.c.h.b16 %v467
    %v1665 = vunpack.c.l.b16 %v468
    %v1666 = vunpack.c.h.b16 %v468
    %v1667 = vunpack.c.l.b16 %v469
    %v1668 = vunpack.c.h.b16 %v469
    %v1669 = vunpack.c.l.b16 %v470
    %v1670 = vunpack.c.h.b16 %v470
    %v1671 = vpack.c.b16 %v911, %v903
    %v1672 = vpack.c.b16 %v912, %v904
    %v1673 = vpack.c.b16 %v913, %v905
    %v1674 = vpack.c.b16 %v914, %v906
    %v1675 = vpack.c.b16 %v915, %v907
    %v1676 = vpack.c.b16 %v916, %v908
    %v1677 = vpack.c.b16 %v917, %v909
    %v1678 = vpack.c.b16 %v918, %v910
    %v1679 = vpack.c.b16 %v927, %v919
    %v1680 = vpack.c.b16 %v928, %v920
    %v1681 = vpack.c.b16 %v929, %v921
    %v1682 = vpack.c.b16 %v930, %v922
    %v1683 = vpack.c.b16 %v931, %v923
    %v1684 = vpack.c.b16 %v932, %v924
    %v1685 = vpack.c.b16 %v933, %v925
    %v1686 = vpack.c.b16 %v934, %v926
    %v1687 = vpack.c.b16 %v943, %v935
    %v1688 = vpack.c.b16 %v944, %v936
    %v1689 = vpack.c.b16 %v945, %v937
    %v1690 = vpack.c.b16 %v946, %v938
    %v1691 = vpack.c.b16 %v947, %v939
    %v1692 = vpack.c.b16 %v948, %v940
    %v1693 = vpack.c.b16 %v949, %v941
    %v1694 = vpack.c.b16 %v950, %v942
    %v1695 = vpack.c.b16 %v959, %v951
    %v1696 = vpack.c.b16 %v960, %v952
    %v1697 = vpack.c.b16 %v961, %v953
    %v1698 = vpack.c.b16 %v962, %v954
    %v1699 = vpack.c.b16 %v963, %v955
    %v1700 = vpack.c.b16 %v964, %v956
    %v1701 = vpack.c.b16 %v965, %v957
    %v1702 = vpack.c.b16 %v966, %v958
    %v1703 = vpack.c.b16 %v975, %v967
    %v1704 = vpack.c.b16 %v976, %v968
    %v1705 = vpack.c.b16 %v977, %v969
    %v1706 = vpack.c.b16 %v978, %v970
    %v1707 = vpack.c.b16 %v979, %v971
    %v1708 = vpack.c.b16 %v980, %v972
    %v1709 = vpack.c.b16 %v981, %v973
    %v1710 = vpack.c.b16 %v982, %v974
    %v1711 = vpack.c.b16 %v991, %v983
    %v1712 = vpack.c.b16 %v992, %v984
    %v1713 = vpack.c.b16 %v993, %v985
    %v1714 = vpack.c.b16 %v994, %v986
    %v1715 = vpack.c.b16 %v995, %v987
    %v1716 = vpack.c.b16 %v996, %v988
    %v1717 = vpack.c.b16 %v997, %v989
    %v1718 = vpack.c.b16 %v998, %v990
    %v1719 = vpack.c.b16 %v1007, %v999
    %v1720 = vpack.c.b16 %v1008, %v1000
    %v1721 = vpack.c.b16 %v1009, %v1001
    %v1722 = vpack.c.b16 %v1010, %v1002
    %v1723 = vpack.c.b16 %v1011, %v1003
    %v1724 = vpack.c.b16 %v1012, %v1004
    %v1725 = vpack.c.b16 %v1013, %v1005
    %v1726 = vpack.c.b16 %v1014, %v1006
    %v1727 = vpack.c.b16 %v1023, %v1015
    %v1728 = vpack.c.b16 %v1024, %v1016
    %v1729 = vpack.c.b16 %v1025, %v1017
    %v1730 = vpack.c.b16 %v1026, %v1018
    %v1731 = vpack.c.b16 %v1027, %v1019
    %v1732 = vpack.c.b16 %v1028, %v1020
    %v1733 = vpack.c.b16 %v1029, %v1021
    %v1734 = vpack.c.b16 %v1030, %v1022
    %v1735 = vpack.c.b16 %v1039, %v1031
    %v1736 = vpack.c.b16 %v1040, %v1032
    %v1737 = vpack.c.b16 %v1041, %v1033
    %v1738 = vpack.c.b16 %v1042, %v1034
    %v1739 = vpack.c.b16 %v1043, %v1035
    %v1740 = vpack.c.b16 %v1044, %v1036
    %v1741 = vpack.c.b16 %v1045, %v1037
    %v1742 = vpack.c.b16 %v1046, %v1038
    %v1743 = vpack.c.b16 %v1055, %v1047
    %v1744 = vpack.c.b16 %v1056, %v1048
    %v1745 = vpack.c.b16 %v1057, %v1049
    %v1746 = vpack.c.b16 %v1058, %v1050
    %v1747 = vpack.c.b16 %v1059, %v1051
    %v1748 = vpack.c.b16 %v1060, %v1052
    %v1749 = vpack.c.b16 %v1061, %v1053
    %v1750 = vpack.c.b16 %v1062, %v1054
    %v1751 = vpack.c.b16 %v1071, %v1063
    %v1752 = vpack.c.b16 %v1072, %v1064
    %v1753 = vpack.c.b16 %v1073, %v1065
    %v1754 = vpack.c.b16 %v1074, %v1066
    %v1755 = vpack.c.b16 %v1075, %v1067
    %v1756 = vpack.c.b16 %v1076, %v1068
    %v1757 = vpack.c.b16 %v1077, %v1069
    %v1758 = vpack.c.b16 %v1078, %v1070
    %v1759 = vpack.c.b16 %v1087, %v1079
    %v1760 = vpack.c.b16 %v1088, %v1080
    %v1761 = vpack.c.b16 %v1089, %v1081
    %v1762 = vpack.c.b16 %v1090, %v1082
    %v1763 = vpack.c.b16 %v1091, %v1083
    %v1764 = vpack.c.b16 %v1092, %v1084
    %v1765 = vpack.c.b16 %v1093, %v1085
    %v1766 = vpack.c.b16 %v1094, %v1086
    %v1767 = vpack.c.b16 %v1103, %v1095
    %v1768 = vpack.c.b16 %v1104, %v1096
    %v1769 = vpack.c.b16 %v1105, %v1097
    %v1770 = vpack.c.b16 %v1106, %v1098
    %v1771 = vpack.c.b16 %v1107, %v1099
    %v1772 = vpack.c.b16 %v1108, %v1100
    %v1773 = vpack.c.b16 %v1109, %v1101
    %v1774 = vpack.c.b16 %v1110, %v1102
    %v1775 = vpack.c.b16 %v1119, %v1111
    %v1776 = vpack.c.b16 %v1120, %v1112
    %v1777 = vpack.c.b16 %v1121, %v1113
    %v1778 = vpack.c.b16 %v1122, %v1114
    %v1779 = vpack.c.b16 %v1123, %v1115
    %v1780 = vpack.c.b16 %v1124, %v1116
    %v1781 = vpack.c.b16 %v1125, %v1117
    %v1782 = vpack.c.b16 %v1126, %v1118
    %v1783 = vpack.c.b16 %v1135, %v1127
    %v1784 = vpack.c.b16 %v1136, %v1128
    %v1785 = vpack.c.b16 %v1137, %v1129
    %v1786 = vpack.c.b16 %v1138, %v1130
    %v1787 = vpack.c.b16 %v1139, %v1131
    %v1788 = vpack.c.b16 %v1140, %v1132
    %v1789 = vpack.c.b16 %v1141, %v1133
    %v1790 = vpack.c.b16 %v1142, %v1134
    %v1791 = vpack.c.b16 %v1151, %v1143
    %v1792 = vpack.c.b16 %v1152, %v1144
    %v1793 = vpack.c.b16 %v1153, %v1145
    %v1794 = vpack.c.b16 %v1154, %v1146
    %v1795 = vpack.c.b16 %v1155, %v1147
    %v1796 = vpack.c.b16 %v1156, %v1148
    %v1797 = vpack.c.b16 %v1157, %v1149
    %v1798 = vpack.c.b16 %v1158, %v1150
    %v1799 = vpack.c.b16 %v1167, %v1159
    %v1800 = vpack.c.b16 %v1168, %v1160
    %v1801 = vpack.c.b16 %v1169, %v1161
    %v1802 = vpack.c.b16 %v1170, %v1162
    %v1803 = vpack.c.b16 %v1171, %v1163
    %v1804 = vpack.c.b16 %v1172, %v1164
    %v1805 = vpack.c.b16 %v1173, %v1165
    %v1806 = vpack.c.b16 %v1174, %v1166
    %v1807 = vpack.c.b16 %v1183, %v1175
    %v1808 = vpack.c.b16 %v1184, %v1176
    %v1809 = vpack.c.b16 %v1185, %v1177
    %v1810 = vpack.c.b16 %v1186, %v1178
    %v1811 = vpack.c.b16 %v1187, %v1179
    %v1812 = vpack.c.b16 %v1188, %v1180
    %v1813 = vpack.c.b16 %v1189, %v1181
    %v1814 = vpack.c.b16 %v1190, %v1182
    %v1815 = vpack.c.b16 %v1199, %v1191
    %v1816 = vpack.c.b16 %v1200, %v1192
    %v1817 = vpack.c.b16 %v1201, %v1193
    %v1818 = vpack.c.b16 %v1202, %v1194
    %v1819 = vpack.c.b16 %v1203, %v1195
    %v1820 = vpack.c.b16 %v1204, %v1196
    %v1821 = vpack.c.b16 %v1205, %v1197
    %v1822 = vpack.c.b16 %v1206, %v1198
    %v1823 = vpack.c.b16 %v1215, %v1207
    %v1824 = vpack.c.b16 %v1216, %v1208
    %v1825 = vpack.c.b16 %v1217, %v1209
    %v1826 = vpack.c.b16 %v1218, %v1210
    %v1827 = vpack.c.b16 %v1219, %v1211
    %v1828 = vpack.c.b16 %v1220, %v1212
    %v1829 = vpack.c.b16 %v1221, %v1213
    %v1830 = vpack.c.b16 %v1222, %v1214
    %v1831 = vpack.c.b16 %v1231, %v1223
    %v1832 = vpack.c.b16 %v1232, %v1224
    %v1833 = vpack.c.b16 %v1233, %v1225
    %v1834 = vpack.c.b16 %v1234, %v1226
    %v1835 = vpack.c.b16 %v1235, %v1227
    %v1836 = vpack.c.b16 %v1236, %v1228
    %v1837 = vpack.c.b16 %v1237, %v1229
    %v1838 = vpack.c.b16 %v1238, %v1230
    %v1839 = vpack.c.b16 %v1247, %v1239
    %v1840 = vpack.c.b16 %v1248, %v1240
    %v1841 = vpack.c.b16 %v1249, %v1241
    %v1842 = vpack.c.b16 %v1250, %v1242
    %v1843 = vpack.c.b16 %v1251, %v1243
    %v1844 = vpack.c.b16 %v1252, %v1244
    %v1845 = vpack.c.b16 %v1253, %v1245
    %v1846 = vpack.c.b16 %v1254, %v1246
    %v1847 = vpack.c.b16 %v1263, %v1255
    %v1848 = vpack.c.b16 %v1264, %v1256
    %v1849 = vpack.c.b16 %v1265, %v1257
    %v1850 = vpack.c.b16 %v1266, %v1258
    %v1851 = vpack.c.b16 %v1267, %v1259
    %v1852 = vpack.c.b16 %v1268, %v1260
    %v1853 = vpack.c.b16 %v1269, %v1261
    %v1854 = vpack.c.b16 %v1270, %v1262
    %v1855 = vpack.c.b16 %v1279, %v1271
    %v1856 = vpack.c.b16 %v1280, %v1272
    %v1857 = vpack.c.b16 %v1281, %v1273
    %v1858 = vpack.c.b16 %v1282, %v1274
    %v1859 = vpack.c.b16 %v1283, %v1275
    %v1860 = vpack.c.b16 %v1284, %v1276
    %v1861 = vpack.c.b16 %v1285, %v1277
    %v1862 = vpack.c.b16 %v1286, %v1278
    %v1863 = vpack.c.b16 %v1295, %v1287
    %v1864 = vpack.c.b16 %v1296, %v1288
    %v1865 = vpack.c.b16 %v1297, %v1289
    %v1866 = vpack.c.b16 %v1298, %v1290
    %v1867 = vpack.c.b16 %v1299, %v1291
    %v1868 = vpack.c.b16 %v1300, %v1292
    %v1869 = vpack.c.b16 %v1301, %v1293
    %v1870 = vpack.c.b16 %v1302, %v1294
    %v1871 = vpack.c.b16 %v1311, %v1303
    %v1872 = vpack.c.b16 %v1312, %v1304
    %v1873 = vpack.c.b16 %v1313, %v1305
    %v1874 = vpack.c.b16 %v1314, %v1306
    %v1875 = vpack.c.b16 %v1315, %v1307
    %v1876 = vpack.c.b16 %v1316, %v1308
    %v1877 = vpack.c.b16 %v1317, %v1309
    %v1878 = vpack.c.b16 %v1318, %v1310
    %v1879 = vpack.c.b16 %v1327, %v1319
    %v1880 = vpack.c.b16 %v1328, %v1320
    %v1881 = vpack.c.b16 %v1329, %v1321
    %v1882 = vpack.c.b16 %v1330, %v1322
    %v1883 = vpack.c.b16 %v1331, %v1323
    %v1884 = vpack.c.b16 %v1332, %v1324
    %v1885 = vpack.c.b16 %v1333, %v1325
    %v1886 = vpack.c.b16 %v1334, %v1326
    %v1887 = vpack.c.b16 %v1343, %v1335
    %v1888 = vpack.c.b16 %v1344, %v1336
    %v1889 = vpack.c.b16 %v1345, %v1337
    %v1890 = vpack.c.b16 %v1346, %v1338
    %v1891 = vpack.c.b16 %v1347, %v1339
    %v1892 = vpack.c.b16 %v1348, %v1340
    %v1893 = vpack.c.b16 %v1349, %v1341
    %v1894 = vpack.c.b16 %v1350, %v1342
    %v1895 = vpack.c.b16 %v1359, %v1351
    %v1896 = vpack.c.b16 %v1360, %v1352
    %v1897 = vpack.c.b16 %v1361, %v1353
    %v1898 = vpack.c.b16 %v1362, %v1354
    %v1899 = vpack.c.b16 %v1363, %v1355
    %v1900 = vpack.c.b16 %v1364, %v1356
    %v1901 = vpack.c.b16 %v1365, %v1357
    %v1902 = vpack.c.b16 %v1366, %v1358
    %v1903 = vpack.c.b16 %v1375, %v1367
    %v1904 = vpack.c.b16 %v1376, %v1368
    %v1905 = vpack.c.b16 %v1377, %v1369
    %v1906 = vpack.c.b16 %v1378, %v1370
    %v1907 = vpack.c.b16 %v1379, %v1371
    %v1908 = vpack.c.b16 %v1380, %v1372
    %v1909 = vpack.c.b16 %v1381, %v1373
    %v1910 = vpack.c.b16 %v1382, %v1374
    %v1911 = vpack.c.b16 %v1391, %v1383
    %v1912 = vpack.c.b16 %v1392, %v1384
    %v1913 = vpack.c.b16 %v1393, %v1385
    %v1914 = vpack.c.b16 %v1394, %v1386
    %v1915 = vpack.c.b16 %v1395, %v1387
    %v1916 = vpack.c.b16 %v1396, %v1388
    %v1917 = vpack.c.b16 %v1397, %v1389
    %v1918 = vpack.c.b16 %v1398, %v1390
    %v1919 = vpack.c.b16 %v1407, %v1399
    %v1920 = vpack.c.b16 %v1408, %v1400
    %v1921 = vpack.c.b16 %v1409, %v1401
    %v1922 = vpack.c.b16 %v1410, %v1402
    %v1923 = vpack.c.b16 %v1411, %v1403
    %v1924 = vpack.c.b16 %v1412, %v1404
    %v1925 = vpack.c.b16 %v1413, %v1405
    %v1926 = vpack.c.b16 %v1414, %v1406
    %v1927 = vpack.c.b16 %v1423, %v1415
    %v1928 = vpack.c.b16 %v1424, %v1416
    %v1929 = vpack.c.b16 %v1425, %v1417
    %v1930 = vpack.c.b16 %v1426, %v1418
    %v1931 = vpack.c.b16 %v1427, %v1419
    %v1932 = vpack.c.b16 %v1428, %v1420
    %v1933 = vpack.c.b16 %v1429, %v1421
    %v1934 = vpack.c.b16 %v1430, %v1422
    %v1935 = vpack.c.b16 %v1439, %v1431
    %v1936 = vpack.c.b16 %v1440, %v1432
    %v1937 = vpack.c.b16 %v1441, %v1433
    %v1938 = vpack.c.b16 %v1442, %v1434
    %v1939 = vpack.c.b16 %v1443, %v1435
    %v1940 = vpack.c.b16 %v1444, %v1436
    %v1941 = vpack.c.b16 %v1445, %v1437
    %v1942 = vpack.c.b16 %v1446, %v1438
    %v1943 = vpack.c.b16 %v1455, %v1447
    %v1944 = vpack.c.b16 %v1456, %v1448
    %v1945 = vpack.c.b16 %v1457, %v1449
    %v1946 = vpack.c.b16 %v1458, %v1450
    %v1947 = vpack.c.b16 %v1459, %v1451
    %v1948 = vpack.c.b16 %v1460, %v1452
    %v1949 = vpack.c.b16 %v1461, %v1453
    %v1950 = vpack.c.b16 %v1462, %v1454
    %v1951 = vpack.c.b16 %v1471, %v1463
    %v1952 = vpack.c.b16 %v1472, %v1464
    %v1953 = vpack.c.b16 %v1473, %v1465
    %v1954 = vpack.c.b16 %v1474, %v1466
    %v1955 = vpack.c.b16 %v1475, %v1467
    %v1956 = vpack.c.b16 %v1476, %v1468
    %v1957 = vpack.c.b16 %v1477, %v1469
    %v1958 = vpack.c.b16 %v1478, %v1470
    %v1959 = vpack.c.b16 %v1487, %v1479
    %v1960 = vpack.c.b16 %v1488, %v1480
    %v1961 = vpack.c.b16 %v1489, %v1481
    %v1962 = vpack.c.b16 %v1490, %v1482
    %v1963 = vpack.c.b16 %v1491, %v1483
    %v1964 = vpack.c.b16 %v1492, %v1484
    %v1965 = vpack.c.b16 %v1493, %v1485
    %v1966 = vpack.c.b16 %v1494, %v1486
    %v1967 = vpack.c.b16 %v1503, %v1495
    %v1968 = vpack.c.b16 %v1504, %v1496
    %v1969 = vpack.c.b16 %v1505, %v1497
    %v1970 = vpack.c.b16 %v1506, %v1498
    %v1971 = vpack.c.b16 %v1507, %v1499
    %v1972 = vpack.c.b16 %v1508, %v1500
    %v1973 = vpack.c.b16 %v1509, %v1501
    %v1974 = vpack.c.b16 %v1510, %v1502
    %v1975 = vpack.c.b16 %v1519, %v1511
    %v1976 = vpack.c.b16 %v1520, %v1512
    %v1977 = vpack.c.b16 %v1521, %v1513
    %v1978 = vpack.c.b16 %v1522, %v1514
    %v1979 = vpack.c.b16 %v1523, %v1515
    %v1980 = vpack.c.b16 %v1524, %v1516
    %v1981 = vpack.c.b16 %v1525, %v1517
    %v1982 = vpack.c.b16 %v1526, %v1518
    %v1983 = vpack.c.b16 %v1535, %v1527
    %v1984 = vpack.c.b16 %v1536, %v1528
    %v1985 = vpack.c.b16 %v1537, %v1529
    %v1986 = vpack.c.b16 %v1538, %v1530
    %v1987 = vpack.c.b16 %v1539, %v1531
    %v1988 = vpack.c.b16 %v1540, %v1532
    %v1989 = vpack.c.b16 %v1541, %v1533
    %v1990 = vpack.c.b16 %v1542, %v1534
    %v1991 = vpack.c.b16 %v1551, %v1543
    %v1992 = vpack.c.b16 %v1552, %v1544
    %v1993 = vpack.c.b16 %v1553, %v1545
    %v1994 = vpack.c.b16 %v1554, %v1546
    %v1995 = vpack.c.b16 %v1555, %v1547
    %v1996 = vpack.c.b16 %v1556, %v1548
    %v1997 = vpack.c.b16 %v1557, %v1549
    %v1998 = vpack.c.b16 %v1558, %v1550
    %v1999 = vpack.c.b16 %v1567, %v1559
    %v2000 = vpack.c.b16 %v1568, %v1560
    %v2001 = vpack.c.b16 %v1569, %v1561
    %v2002 = vpack.c.b16 %v1570, %v1562
    %v2003 = vpack.c.b16 %v1571, %v1563
    %v2004 = vpack.c.b16 %v1572, %v1564
    %v2005 = vpack.c.b16 %v1573, %v1565
    %v2006 = vpack.c.b16 %v1574, %v1566
    %v2007 = vpack.c.b16 %v1583, %v1575
    %v2008 = vpack.c.b16 %v1584, %v1576
    %v2009 = vpack.c.b16 %v1585, %v1577
    %v2010 = vpack.c.b16 %v1586, %v1578
    %v2011 = vpack.c.b16 %v1587, %v1579
    %v2012 = vpack.c.b16 %v1588, %v1580
    %v2013 = vpack.c.b16 %v1589, %v1581
    %v2014 = vpack.c.b16 %v1590, %v1582
    %v2015 = vpack.c.b16 %v1599, %v1591
    %v2016 = vpack.c.b16 %v1600, %v1592
    %v2017 = vpack.c.b16 %v1601, %v1593
    %v2018 = vpack.c.b16 %v1602, %v1594
    %v2019 = vpack.c.b16 %v1603, %v1595
    %v2020 = vpack.c.b16 %v1604, %v1596
    %v2021 = vpack.c.b16 %v1605, %v1597
    %v2022 = vpack.c.b16 %v1606, %v1598
    %v2023 = vpack.c.b16 %v1615, %v1607
    %v2024 = vpack.c.b16 %v1616, %v1608
    %v2025 = vpack.c.b16 %v1617, %v1609
    %v2026 = vpack.c.b16 %v1618, %v1610
    %v2027 = vpack.c.b16 %v1619, %v1611
    %v2028 = vpack.c.b16 %v1620, %v1612
    %v2029 = vpack.c.b16 %v1621, %v1613
    %v2030 = vpack.c.b16 %v1622, %v1614
    %v2031 = vpack.c.b16 %v1631, %v1623
    %v2032 = vpack.c.b16 %v1632, %v1624
    %v2033 = vpack.c.b16 %v1633, %v1625
    %v2034 = vpack.c.b16 %v1634, %v1626
    %v2035 = vpack.c.b16 %v1635, %v1627
    %v2036 = vpack.c.b16 %v1636, %v1628
    %v2037 = vpack.c.b16 %v1637, %v1629
    %v2038 = vpack.c.b16 %v1638, %v1630
    %v2039 = vpack.c.b16 %v1647, %v1639
    %v2040 = vpack.c.b16 %v1648, %v1640
    %v2041 = vpack.c.b16 %v1649, %v1641
    %v2042 = vpack.c.b16 %v1650, %v1642
    %v2043 = vpack.c.b16 %v1651, %v1643
    %v2044 = vpack.c.b16 %v1652, %v1644
    %v2045 = vpack.c.b16 %v1653, %v1645
    %v2046 = vpack.c.b16 %v1654, %v1646
    %v2047 = vpack.c.b16 %v1663, %v1655
    %v2048 = vpack.c.b16 %v1664, %v1656
    %v2049 = vpack.c.b16 %v1665, %v1657
    %v2050 = vpack.c.b16 %v1666, %v1658
    %v2051 = vpack.c.b16 %v1667, %v1659
    %v2052 = vpack.c.b16 %v1668, %v1660
    %v2053 = vpack.c.b16 %v1669, %v1661
    %v2054 = vpack.c.b16 %v1670, %v1662
    %2439 = vmatpush.bf16.msra.mxu0 %v1727
    %2440 = vmatpush.bf16.msra.mxu0 %v1719
    %2441 = vmatpush.bf16.msra.mxu0 %v1711
    %2442 = vmatpush.bf16.msra.mxu0 %v1703
    %2443 = vmatpush.bf16.msra.mxu0 %v1695
    %2444 = vmatpush.bf16.msra.mxu0 %v1687
    %2445 = vmatpush.bf16.msra.mxu0 %v1679
    %2446 = vmatpush.bf16.msra.mxu0 %v1671
    %2447 = vmatmul.bf16.gmra.mxu0 %v507
    %v2448 = vpop.f32.mrf.mxu0
    %v2449 = vadd.f32 %v473, %v2448
    %v2450 = vpop.f32.mrf.mxu0
    %v2451 = vadd.f32 %v473, %v2450
    %2452 = vdwg.mxu0
    %2453 = vmatpush.bf16.msra.mxu0 %v1791
    %2454 = vmatpush.bf16.msra.mxu0 %v1783
    %2455 = vmatpush.bf16.msra.mxu0 %v1775
    %2456 = vmatpush.bf16.msra.mxu0 %v1767
    %2457 = vmatpush.bf16.msra.mxu0 %v1759
    %2458 = vmatpush.bf16.msra.mxu0 %v1751
    %2459 = vmatpush.bf16.msra.mxu0 %v1743
    %2460 = vmatpush.bf16.msra.mxu0 %v1735
    %2461 = vmatmul.bf16.gmra.mxu0 %v508
    %v2462 = vpop.f32.mrf.mxu0
    %v2463 = vadd.f32 %v2449, %v2462
    %v2464 = vpop.f32.mrf.mxu0
    %v2465 = vadd.f32 %v2451, %v2464
    %2466 = vdwg.mxu0
    %2467 = vmatpush.bf16.msra.mxu0 %v1855
    %2468 = vmatpush.bf16.msra.mxu0 %v1847
    %2469 = vmatpush.bf16.msra.mxu0 %v1839
    %2470 = vmatpush.bf16.msra.mxu0 %v1831
    %2471 = vmatpush.bf16.msra.mxu0 %v1823
    %2472 = vmatpush.bf16.msra.mxu0 %v1815
    %2473 = vmatpush.bf16.msra.mxu0 %v1807
    %2474 = vmatpush.bf16.msra.mxu0 %v1799
    %2475 = vmatmul.bf16.gmra.mxu0 %v509
    %v2476 = vpop.f32.mrf.mxu0
    %v2477 = vadd.f32 %v2463, %v2476
    %v2478 = vpop.f32.mrf.mxu0
    %v2479 = vadd.f32 %v2465, %v2478
    %2480 = vdwg.mxu0
    %2481 = vmatpush.bf16.msra.mxu0 %v1919
    %2482 = vmatpush.bf16.msra.mxu0 %v1911
    %2483 = vmatpush.bf16.msra.mxu0 %v1903
    %2484 = vmatpush.bf16.msra.mxu0 %v1895
    %2485 = vmatpush.bf16.msra.mxu0 %v1887
    %2486 = vmatpush.bf16.msra.mxu0 %v1879
    %2487 = vmatpush.bf16.msra.mxu0 %v1871
    %2488 = vmatpush.bf16.msra.mxu0 %v1863
    %2489 = vmatmul.bf16.gmra.mxu0 %v510
    %v2490 = vpop.f32.mrf.mxu0
    %v2491 = vadd.f32 %v2477, %v2490
    %v2492 = vpop.f32.mrf.mxu0
    %v2493 = vadd.f32 %v2479, %v2492
    %2494 = vdwg.mxu0
    %2495 = vmatpush.bf16.msra.mxu0 %v1983
    %2496 = vmatpush.bf16.msra.mxu0 %v1975
    %2497 = vmatpush.bf16.msra.mxu0 %v1967
    %2498 = vmatpush.bf16.msra.mxu0 %v1959
    %2499 = vmatpush.bf16.msra.mxu0 %v1951
    %2500 = vmatpush.bf16.msra.mxu0 %v1943
    %2501 = vmatpush.bf16.msra.mxu0 %v1935
    %2502 = vmatpush.bf16.msra.mxu0 %v1927
    %2503 = vmatmul.bf16.gmra.mxu0 %v511
    %v2504 = vpop.f32.mrf.mxu0
    %v2505 = vadd.f32 %v2491, %v2504
    %v2506 = vpop.f32.mrf.mxu0
    %v2507 = vadd.f32 %v2493, %v2506
    %2508 = vdwg.mxu0
    %2509 = vmatpush.bf16.msra.mxu0 %v2047
    %2510 = vmatpush.bf16.msra.mxu0 %v2039
    %2511 = vmatpush.bf16.msra.mxu0 %v2031
    %2512 = vmatpush.bf16.msra.mxu0 %v2023
    %2513 = vmatpush.bf16.msra.mxu0 %v2015
    %2514 = vmatpush.bf16.msra.mxu0 %v2007
    %2515 = vmatpush.bf16.msra.mxu0 %v1999
    %2516 = vmatpush.bf16.msra.mxu0 %v1991
    %2517 = vmatmul.bf16.gmra.mxu0 %v512
    %v2518 = vpop.f32.mrf.mxu0
    %v2519 = vadd.f32 %v2505, %v2518
    %v2520 = vpop.f32.mrf.mxu0
    %v2521 = vadd.f32 %v2507, %v2520
    %2522 = vdwg.mxu0
    %2523 = vmatpush.bf16.msra.mxu0 %v1728
    %2524 = vmatpush.bf16.msra.mxu0 %v1720
    %2525 = vmatpush.bf16.msra.mxu0 %v1712
    %2526 = vmatpush.bf16.msra.mxu0 %v1704
    %2527 = vmatpush.bf16.msra.mxu0 %v1696
    %2528 = vmatpush.bf16.msra.mxu0 %v1688
    %2529 = vmatpush.bf16.msra.mxu0 %v1680
    %2530 = vmatpush.bf16.msra.mxu0 %v1672
    %2531 = vmatmul.bf16.gmra.mxu0 %v507
    %v2532 = vpop.f32.mrf.mxu0
    %v2533 = vadd.f32 %v474, %v2532
    %v2534 = vpop.f32.mrf.mxu0
    %v2535 = vadd.f32 %v474, %v2534
    %2536 = vdwg.mxu0
    %2537 = vmatpush.bf16.msra.mxu0 %v1792
    %2538 = vmatpush.bf16.msra.mxu0 %v1784
    %2539 = vmatpush.bf16.msra.mxu0 %v1776
    %2540 = vmatpush.bf16.msra.mxu0 %v1768
    %2541 = vmatpush.bf16.msra.mxu0 %v1760
    %2542 = vmatpush.bf16.msra.mxu0 %v1752
    %2543 = vmatpush.bf16.msra.mxu0 %v1744
    %2544 = vmatpush.bf16.msra.mxu0 %v1736
    %2545 = vmatmul.bf16.gmra.mxu0 %v508
    %v2546 = vpop.f32.mrf.mxu0
    %v2547 = vadd.f32 %v2533, %v2546
    %v2548 = vpop.f32.mrf.mxu0
    %v2549 = vadd.f32 %v2535, %v2548
    %2550 = vdwg.mxu0
    %2551 = vmatpush.bf16.msra.mxu0 %v1856
    %2552 = vmatpush.bf16.msra.mxu0 %v1848
    %2553 = vmatpush.bf16.msra.mxu0 %v1840
    %2554 = vmatpush.bf16.msra.mxu0 %v1832
    %2555 = vmatpush.bf16.msra.mxu0 %v1824
    %2556 = vmatpush.bf16.msra.mxu0 %v1816
    %2557 = vmatpush.bf16.msra.mxu0 %v1808
    %2558 = vmatpush.bf16.msra.mxu0 %v1800
    %2559 = vmatmul.bf16.gmra.mxu0 %v509
    %v2560 = vpop.f32.mrf.mxu0
    %v2561 = vadd.f32 %v2547, %v2560
    %v2562 = vpop.f32.mrf.mxu0
    %v2563 = vadd.f32 %v2549, %v2562
    %2564 = vdwg.mxu0
    %2565 = vmatpush.bf16.msra.mxu0 %v1920
    %2566 = vmatpush.bf16.msra.mxu0 %v1912
    %2567 = vmatpush.bf16.msra.mxu0 %v1904
    %2568 = vmatpush.bf16.msra.mxu0 %v1896
    %2569 = vmatpush.bf16.msra.mxu0 %v1888
    %2570 = vmatpush.bf16.msra.mxu0 %v1880
    %2571 = vmatpush.bf16.msra.mxu0 %v1872
    %2572 = vmatpush.bf16.msra.mxu0 %v1864
    %2573 = vmatmul.bf16.gmra.mxu0 %v510
    %v2574 = vpop.f32.mrf.mxu0
    %v2575 = vadd.f32 %v2561, %v2574
    %v2576 = vpop.f32.mrf.mxu0
    %v2577 = vadd.f32 %v2563, %v2576
    %2578 = vdwg.mxu0
    %2579 = vmatpush.bf16.msra.mxu0 %v1984
    %2580 = vmatpush.bf16.msra.mxu0 %v1976
    %2581 = vmatpush.bf16.msra.mxu0 %v1968
    %2582 = vmatpush.bf16.msra.mxu0 %v1960
    %2583 = vmatpush.bf16.msra.mxu0 %v1952
    %2584 = vmatpush.bf16.msra.mxu0 %v1944
    %2585 = vmatpush.bf16.msra.mxu0 %v1936
    %2586 = vmatpush.bf16.msra.mxu0 %v1928
    %2587 = vmatmul.bf16.gmra.mxu0 %v511
    %v2588 = vpop.f32.mrf.mxu0
    %v2589 = vadd.f32 %v2575, %v2588
    %v2590 = vpop.f32.mrf.mxu0
    %v2591 = vadd.f32 %v2577, %v2590
    %2592 = vdwg.mxu0
    %2593 = vmatpush.bf16.msra.mxu0 %v2048
    %2594 = vmatpush.bf16.msra.mxu0 %v2040
    %2595 = vmatpush.bf16.msra.mxu0 %v2032
    %2596 = vmatpush.bf16.msra.mxu0 %v2024
    %2597 = vmatpush.bf16.msra.mxu0 %v2016
    %2598 = vmatpush.bf16.msra.mxu0 %v2008
    %2599 = vmatpush.bf16.msra.mxu0 %v2000
    %2600 = vmatpush.bf16.msra.mxu0 %v1992
    %2601 = vmatmul.bf16.gmra.mxu0 %v512
    %v2602 = vpop.f32.mrf.mxu0
    %v2603 = vadd.f32 %v2589, %v2602
    %v2604 = vpop.f32.mrf.mxu0
    %v2605 = vadd.f32 %v2591, %v2604
    %2606 = vdwg.mxu0
    %2607 = vmatpush.bf16.msra.mxu0 %v1729
    %2608 = vmatpush.bf16.msra.mxu0 %v1721
    %2609 = vmatpush.bf16.msra.mxu0 %v1713
    %2610 = vmatpush.bf16.msra.mxu0 %v1705
    %2611 = vmatpush.bf16.msra.mxu0 %v1697
    %2612 = vmatpush.bf16.msra.mxu0 %v1689
    %2613 = vmatpush.bf16.msra.mxu0 %v1681
    %2614 = vmatpush.bf16.msra.mxu0 %v1673
    %2615 = vmatmul.bf16.gmra.mxu0 %v507
    %v2616 = vpop.f32.mrf.mxu0
    %v2617 = vadd.f32 %v475, %v2616
    %v2618 = vpop.f32.mrf.mxu0
    %v2619 = vadd.f32 %v475, %v2618
    %2620 = vdwg.mxu0
    %2621 = vmatpush.bf16.msra.mxu0 %v1793
    %2622 = vmatpush.bf16.msra.mxu0 %v1785
    %2623 = vmatpush.bf16.msra.mxu0 %v1777
    %2624 = vmatpush.bf16.msra.mxu0 %v1769
    %2625 = vmatpush.bf16.msra.mxu0 %v1761
    %2626 = vmatpush.bf16.msra.mxu0 %v1753
    %2627 = vmatpush.bf16.msra.mxu0 %v1745
    %2628 = vmatpush.bf16.msra.mxu0 %v1737
    %2629 = vmatmul.bf16.gmra.mxu0 %v508
    %v2630 = vpop.f32.mrf.mxu0
    %v2631 = vadd.f32 %v2617, %v2630
    %v2632 = vpop.f32.mrf.mxu0
    %v2633 = vadd.f32 %v2619, %v2632
    %2634 = vdwg.mxu0
    %2635 = vmatpush.bf16.msra.mxu0 %v1857
    %2636 = vmatpush.bf16.msra.mxu0 %v1849
    %2637 = vmatpush.bf16.msra.mxu0 %v1841
    %2638 = vmatpush.bf16.msra.mxu0 %v1833
    %2639 = vmatpush.bf16.msra.mxu0 %v1825
    %2640 = vmatpush.bf16.msra.mxu0 %v1817
    %2641 = vmatpush.bf16.msra.mxu0 %v1809
    %2642 = vmatpush.bf16.msra.mxu0 %v1801
    %2643 = vmatmul.bf16.gmra.mxu0 %v509
    %v2644 = vpop.f32.mrf.mxu0
    %v2645 = vadd.f32 %v2631, %v2644
    %v2646 = vpop.f32.mrf.mxu0
    %v2647 = vadd.f32 %v2633, %v2646
    %2648 = vdwg.mxu0
    %2649 = vmatpush.bf16.msra.mxu0 %v1921
    %2650 = vmatpush.bf16.msra.mxu0 %v1913
    %2651 = vmatpush.bf16.msra.mxu0 %v1905
    %2652 = vmatpush.bf16.msra.mxu0 %v1897
    %2653 = vmatpush.bf16.msra.mxu0 %v1889
    %2654 = vmatpush.bf16.msra.mxu0 %v1881
    %2655 = vmatpush.bf16.msra.mxu0 %v1873
    %2656 = vmatpush.bf16.msra.mxu0 %v1865
    %2657 = vmatmul.bf16.gmra.mxu0 %v510
    %v2658 = vpop.f32.mrf.mxu0
    %v2659 = vadd.f32 %v2645, %v2658
    %v2660 = vpop.f32.mrf.mxu0
    %v2661 = vadd.f32 %v2647, %v2660
    %2662 = vdwg.mxu0
    %2663 = vmatpush.bf16.msra.mxu0 %v1985
    %2664 = vmatpush.bf16.msra.mxu0 %v1977
    %2665 = vmatpush.bf16.msra.mxu0 %v1969
    %2666 = vmatpush.bf16.msra.mxu0 %v1961
    %2667 = vmatpush.bf16.msra.mxu0 %v1953
    %2668 = vmatpush.bf16.msra.mxu0 %v1945
    %2669 = vmatpush.bf16.msra.mxu0 %v1937
    %2670 = vmatpush.bf16.msra.mxu0 %v1929
    %2671 = vmatmul.bf16.gmra.mxu0 %v511
    %v2672 = vpop.f32.mrf.mxu0
    %v2673 = vadd.f32 %v2659, %v2672
    %v2674 = vpop.f32.mrf.mxu0
    %v2675 = vadd.f32 %v2661, %v2674
    %2676 = vdwg.mxu0
    %2677 = vmatpush.bf16.msra.mxu0 %v2049
    %2678 = vmatpush.bf16.msra.mxu0 %v2041
    %2679 = vmatpush.bf16.msra.mxu0 %v2033
    %2680 = vmatpush.bf16.msra.mxu0 %v2025
    %2681 = vmatpush.bf16.msra.mxu0 %v2017
    %2682 = vmatpush.bf16.msra.mxu0 %v2009
    %2683 = vmatpush.bf16.msra.mxu0 %v2001
    %2684 = vmatpush.bf16.msra.mxu0 %v1993
    %2685 = vmatmul.bf16.gmra.mxu0 %v512
    %v2686 = vpop.f32.mrf.mxu0
    %v2687 = vadd.f32 %v2673, %v2686
    %v2688 = vpop.f32.mrf.mxu0
    %v2689 = vadd.f32 %v2675, %v2688
    %2690 = vdwg.mxu0
    %2691 = vmatpush.bf16.msra.mxu0 %v1730
    %2692 = vmatpush.bf16.msra.mxu0 %v1722
    %2693 = vmatpush.bf16.msra.mxu0 %v1714
    %2694 = vmatpush.bf16.msra.mxu0 %v1706
    %2695 = vmatpush.bf16.msra.mxu0 %v1698
    %2696 = vmatpush.bf16.msra.mxu0 %v1690
    %2697 = vmatpush.bf16.msra.mxu0 %v1682
    %2698 = vmatpush.bf16.msra.mxu0 %v1674
    %2699 = vmatmul.bf16.gmra.mxu0 %v507
    %v2700 = vpop.f32.mrf.mxu0
    %v2701 = vadd.f32 %v476, %v2700
    %v2702 = vpop.f32.mrf.mxu0
    %v2703 = vadd.f32 %v476, %v2702
    %2704 = vdwg.mxu0
    %2705 = vmatpush.bf16.msra.mxu0 %v1794
    %2706 = vmatpush.bf16.msra.mxu0 %v1786
    %2707 = vmatpush.bf16.msra.mxu0 %v1778
    %2708 = vmatpush.bf16.msra.mxu0 %v1770
    %2709 = vmatpush.bf16.msra.mxu0 %v1762
    %2710 = vmatpush.bf16.msra.mxu0 %v1754
    %2711 = vmatpush.bf16.msra.mxu0 %v1746
    %2712 = vmatpush.bf16.msra.mxu0 %v1738
    %2713 = vmatmul.bf16.gmra.mxu0 %v508
    %v2714 = vpop.f32.mrf.mxu0
    %v2715 = vadd.f32 %v2701, %v2714
    %v2716 = vpop.f32.mrf.mxu0
    %v2717 = vadd.f32 %v2703, %v2716
    %2718 = vdwg.mxu0
    %2719 = vmatpush.bf16.msra.mxu0 %v1858
    %2720 = vmatpush.bf16.msra.mxu0 %v1850
    %2721 = vmatpush.bf16.msra.mxu0 %v1842
    %2722 = vmatpush.bf16.msra.mxu0 %v1834
    %2723 = vmatpush.bf16.msra.mxu0 %v1826
    %2724 = vmatpush.bf16.msra.mxu0 %v1818
    %2725 = vmatpush.bf16.msra.mxu0 %v1810
    %2726 = vmatpush.bf16.msra.mxu0 %v1802
    %2727 = vmatmul.bf16.gmra.mxu0 %v509
    %v2728 = vpop.f32.mrf.mxu0
    %v2729 = vadd.f32 %v2715, %v2728
    %v2730 = vpop.f32.mrf.mxu0
    %v2731 = vadd.f32 %v2717, %v2730
    %2732 = vdwg.mxu0
    %2733 = vmatpush.bf16.msra.mxu0 %v1922
    %2734 = vmatpush.bf16.msra.mxu0 %v1914
    %2735 = vmatpush.bf16.msra.mxu0 %v1906
    %2736 = vmatpush.bf16.msra.mxu0 %v1898
    %2737 = vmatpush.bf16.msra.mxu0 %v1890
    %2738 = vmatpush.bf16.msra.mxu0 %v1882
    %2739 = vmatpush.bf16.msra.mxu0 %v1874
    %2740 = vmatpush.bf16.msra.mxu0 %v1866
    %2741 = vmatmul.bf16.gmra.mxu0 %v510
    %v2742 = vpop.f32.mrf.mxu0
    %v2743 = vadd.f32 %v2729, %v2742
    %v2744 = vpop.f32.mrf.mxu0
    %v2745 = vadd.f32 %v2731, %v2744
    %2746 = vdwg.mxu0
    %2747 = vmatpush.bf16.msra.mxu0 %v1986
    %2748 = vmatpush.bf16.msra.mxu0 %v1978
    %2749 = vmatpush.bf16.msra.mxu0 %v1970
    %2750 = vmatpush.bf16.msra.mxu0 %v1962
    %2751 = vmatpush.bf16.msra.mxu0 %v1954
    %2752 = vmatpush.bf16.msra.mxu0 %v1946
    %2753 = vmatpush.bf16.msra.mxu0 %v1938
    %2754 = vmatpush.bf16.msra.mxu0 %v1930
    %2755 = vmatmul.bf16.gmra.mxu0 %v511
    %v2756 = vpop.f32.mrf.mxu0
    %v2757 = vadd.f32 %v2743, %v2756
    %v2758 = vpop.f32.mrf.mxu0
    %v2759 = vadd.f32 %v2745, %v2758
    %2760 = vdwg.mxu0
    %2761 = vmatpush.bf16.msra.mxu0 %v2050
    %2762 = vmatpush.bf16.msra.mxu0 %v2042
    %2763 = vmatpush.bf16.msra.mxu0 %v2034
    %2764 = vmatpush.bf16.msra.mxu0 %v2026
    %2765 = vmatpush.bf16.msra.mxu0 %v2018
    %2766 = vmatpush.bf16.msra.mxu0 %v2010
    %2767 = vmatpush.bf16.msra.mxu0 %v2002
    %2768 = vmatpush.bf16.msra.mxu0 %v1994
    %2769 = vmatmul.bf16.gmra.mxu0 %v512
    %v2770 = vpop.f32.mrf.mxu0
    %v2771 = vadd.f32 %v2757, %v2770
    %v2772 = vpop.f32.mrf.mxu0
    %v2773 = vadd.f32 %v2759, %v2772
    %2774 = vdwg.mxu0
    %2775 = vmatpush.bf16.msra.mxu0 %v1731
    %2776 = vmatpush.bf16.msra.mxu0 %v1723
    %2777 = vmatpush.bf16.msra.mxu0 %v1715
    %2778 = vmatpush.bf16.msra.mxu0 %v1707
    %2779 = vmatpush.bf16.msra.mxu0 %v1699
    %2780 = vmatpush.bf16.msra.mxu0 %v1691
    %2781 = vmatpush.bf16.msra.mxu0 %v1683
    %2782 = vmatpush.bf16.msra.mxu0 %v1675
    %2783 = vmatmul.bf16.gmra.mxu0 %v507
    %v2784 = vpop.f32.mrf.mxu0
    %v2785 = vadd.f32 %v477, %v2784
    %v2786 = vpop.f32.mrf.mxu0
    %v2787 = vadd.f32 %v477, %v2786
    %2788 = vdwg.mxu0
    %2789 = vmatpush.bf16.msra.mxu0 %v1795
    %2790 = vmatpush.bf16.msra.mxu0 %v1787
    %2791 = vmatpush.bf16.msra.mxu0 %v1779
    %2792 = vmatpush.bf16.msra.mxu0 %v1771
    %2793 = vmatpush.bf16.msra.mxu0 %v1763
    %2794 = vmatpush.bf16.msra.mxu0 %v1755
    %2795 = vmatpush.bf16.msra.mxu0 %v1747
    %2796 = vmatpush.bf16.msra.mxu0 %v1739
    %2797 = vmatmul.bf16.gmra.mxu0 %v508
    %v2798 = vpop.f32.mrf.mxu0
    %v2799 = vadd.f32 %v2785, %v2798
    %v2800 = vpop.f32.mrf.mxu0
    %v2801 = vadd.f32 %v2787, %v2800
    %2802 = vdwg.mxu0
    %2803 = vmatpush.bf16.msra.mxu0 %v1859
    %2804 = vmatpush.bf16.msra.mxu0 %v1851
    %2805 = vmatpush.bf16.msra.mxu0 %v1843
    %2806 = vmatpush.bf16.msra.mxu0 %v1835
    %2807 = vmatpush.bf16.msra.mxu0 %v1827
    %2808 = vmatpush.bf16.msra.mxu0 %v1819
    %2809 = vmatpush.bf16.msra.mxu0 %v1811
    %2810 = vmatpush.bf16.msra.mxu0 %v1803
    %2811 = vmatmul.bf16.gmra.mxu0 %v509
    %v2812 = vpop.f32.mrf.mxu0
    %v2813 = vadd.f32 %v2799, %v2812
    %v2814 = vpop.f32.mrf.mxu0
    %v2815 = vadd.f32 %v2801, %v2814
    %2816 = vdwg.mxu0
    %2817 = vmatpush.bf16.msra.mxu0 %v1923
    %2818 = vmatpush.bf16.msra.mxu0 %v1915
    %2819 = vmatpush.bf16.msra.mxu0 %v1907
    %2820 = vmatpush.bf16.msra.mxu0 %v1899
    %2821 = vmatpush.bf16.msra.mxu0 %v1891
    %2822 = vmatpush.bf16.msra.mxu0 %v1883
    %2823 = vmatpush.bf16.msra.mxu0 %v1875
    %2824 = vmatpush.bf16.msra.mxu0 %v1867
    %2825 = vmatmul.bf16.gmra.mxu0 %v510
    %v2826 = vpop.f32.mrf.mxu0
    %v2827 = vadd.f32 %v2813, %v2826
    %v2828 = vpop.f32.mrf.mxu0
    %v2829 = vadd.f32 %v2815, %v2828
    %2830 = vdwg.mxu0
    %2831 = vmatpush.bf16.msra.mxu0 %v1987
    %2832 = vmatpush.bf16.msra.mxu0 %v1979
    %2833 = vmatpush.bf16.msra.mxu0 %v1971
    %2834 = vmatpush.bf16.msra.mxu0 %v1963
    %2835 = vmatpush.bf16.msra.mxu0 %v1955
    %2836 = vmatpush.bf16.msra.mxu0 %v1947
    %2837 = vmatpush.bf16.msra.mxu0 %v1939
    %2838 = vmatpush.bf16.msra.mxu0 %v1931
    %2839 = vmatmul.bf16.gmra.mxu0 %v511
    %v2840 = vpop.f32.mrf.mxu0
    %v2841 = vadd.f32 %v2827, %v2840
    %v2842 = vpop.f32.mrf.mxu0
    %v2843 = vadd.f32 %v2829, %v2842
    %2844 = vdwg.mxu0
    %2845 = vmatpush.bf16.msra.mxu0 %v2051
    %2846 = vmatpush.bf16.msra.mxu0 %v2043
    %2847 = vmatpush.bf16.msra.mxu0 %v2035
    %2848 = vmatpush.bf16.msra.mxu0 %v2027
    %2849 = vmatpush.bf16.msra.mxu0 %v2019
    %2850 = vmatpush.bf16.msra.mxu0 %v2011
    %2851 = vmatpush.bf16.msra.mxu0 %v2003
    %2852 = vmatpush.bf16.msra.mxu0 %v1995
    %2853 = vmatmul.bf16.gmra.mxu0 %v512
    %v2854 = vpop.f32.mrf.mxu0
    %v2855 = vadd.f32 %v2841, %v2854
    %v2856 = vpop.f32.mrf.mxu0
    %v2857 = vadd.f32 %v2843, %v2856
    %2858 = vdwg.mxu0
    %2859 = vmatpush.bf16.msra.mxu0 %v1732
    %2860 = vmatpush.bf16.msra.mxu0 %v1724
    %2861 = vmatpush.bf16.msra.mxu0 %v1716
    %2862 = vmatpush.bf16.msra.mxu0 %v1708
    %2863 = vmatpush.bf16.msra.mxu0 %v1700
    %2864 = vmatpush.bf16.msra.mxu0 %v1692
    %2865 = vmatpush.bf16.msra.mxu0 %v1684
    %2866 = vmatpush.bf16.msra.mxu0 %v1676
    %2867 = vmatmul.bf16.gmra.mxu0 %v507
    %v2868 = vpop.f32.mrf.mxu0
    %v2869 = vadd.f32 %v478, %v2868
    %v2870 = vpop.f32.mrf.mxu0
    %v2871 = vadd.f32 %v478, %v2870
    %2872 = vdwg.mxu0
    %2873 = vmatpush.bf16.msra.mxu0 %v1796
    %2874 = vmatpush.bf16.msra.mxu0 %v1788
    %2875 = vmatpush.bf16.msra.mxu0 %v1780
    %2876 = vmatpush.bf16.msra.mxu0 %v1772
    %2877 = vmatpush.bf16.msra.mxu0 %v1764
    %2878 = vmatpush.bf16.msra.mxu0 %v1756
    %2879 = vmatpush.bf16.msra.mxu0 %v1748
    %2880 = vmatpush.bf16.msra.mxu0 %v1740
    %2881 = vmatmul.bf16.gmra.mxu0 %v508
    %v2882 = vpop.f32.mrf.mxu0
    %v2883 = vadd.f32 %v2869, %v2882
    %v2884 = vpop.f32.mrf.mxu0
    %v2885 = vadd.f32 %v2871, %v2884
    %2886 = vdwg.mxu0
    %2887 = vmatpush.bf16.msra.mxu0 %v1860
    %2888 = vmatpush.bf16.msra.mxu0 %v1852
    %2889 = vmatpush.bf16.msra.mxu0 %v1844
    %2890 = vmatpush.bf16.msra.mxu0 %v1836
    %2891 = vmatpush.bf16.msra.mxu0 %v1828
    %2892 = vmatpush.bf16.msra.mxu0 %v1820
    %2893 = vmatpush.bf16.msra.mxu0 %v1812
    %2894 = vmatpush.bf16.msra.mxu0 %v1804
    %2895 = vmatmul.bf16.gmra.mxu0 %v509
    %v2896 = vpop.f32.mrf.mxu0
    %v2897 = vadd.f32 %v2883, %v2896
    %v2898 = vpop.f32.mrf.mxu0
    %v2899 = vadd.f32 %v2885, %v2898
    %2900 = vdwg.mxu0
    %2901 = vmatpush.bf16.msra.mxu0 %v1924
    %2902 = vmatpush.bf16.msra.mxu0 %v1916
    %2903 = vmatpush.bf16.msra.mxu0 %v1908
    %2904 = vmatpush.bf16.msra.mxu0 %v1900
    %2905 = vmatpush.bf16.msra.mxu0 %v1892
    %2906 = vmatpush.bf16.msra.mxu0 %v1884
    %2907 = vmatpush.bf16.msra.mxu0 %v1876
    %2908 = vmatpush.bf16.msra.mxu0 %v1868
    %2909 = vmatmul.bf16.gmra.mxu0 %v510
    %v2910 = vpop.f32.mrf.mxu0
    %v2911 = vadd.f32 %v2897, %v2910
    %v2912 = vpop.f32.mrf.mxu0
    %v2913 = vadd.f32 %v2899, %v2912
    %2914 = vdwg.mxu0
    %2915 = vmatpush.bf16.msra.mxu0 %v1988
    %2916 = vmatpush.bf16.msra.mxu0 %v1980
    %2917 = vmatpush.bf16.msra.mxu0 %v1972
    %2918 = vmatpush.bf16.msra.mxu0 %v1964
    %2919 = vmatpush.bf16.msra.mxu0 %v1956
    %2920 = vmatpush.bf16.msra.mxu0 %v1948
    %2921 = vmatpush.bf16.msra.mxu0 %v1940
    %2922 = vmatpush.bf16.msra.mxu0 %v1932
    %2923 = vmatmul.bf16.gmra.mxu0 %v511
    %v2924 = vpop.f32.mrf.mxu0
    %v2925 = vadd.f32 %v2911, %v2924
    %v2926 = vpop.f32.mrf.mxu0
    %v2927 = vadd.f32 %v2913, %v2926
    %2928 = vdwg.mxu0
    %2929 = vmatpush.bf16.msra.mxu0 %v2052
    %2930 = vmatpush.bf16.msra.mxu0 %v2044
    %2931 = vmatpush.bf16.msra.mxu0 %v2036
    %2932 = vmatpush.bf16.msra.mxu0 %v2028
    %2933 = vmatpush.bf16.msra.mxu0 %v2020
    %2934 = vmatpush.bf16.msra.mxu0 %v2012
    %2935 = vmatpush.bf16.msra.mxu0 %v2004
    %2936 = vmatpush.bf16.msra.mxu0 %v1996
    %2937 = vmatmul.bf16.gmra.mxu0 %v512
    %v2938 = vpop.f32.mrf.mxu0
    %v2939 = vadd.f32 %v2925, %v2938
    %v2940 = vpop.f32.mrf.mxu0
    %v2941 = vadd.f32 %v2927, %v2940
    %2942 = vdwg.mxu0
    %2943 = vmatpush.bf16.msra.mxu0 %v1733
    %2944 = vmatpush.bf16.msra.mxu0 %v1725
    %2945 = vmatpush.bf16.msra.mxu0 %v1717
    %2946 = vmatpush.bf16.msra.mxu0 %v1709
    %2947 = vmatpush.bf16.msra.mxu0 %v1701
    %2948 = vmatpush.bf16.msra.mxu0 %v1693
    %2949 = vmatpush.bf16.msra.mxu0 %v1685
    %2950 = vmatpush.bf16.msra.mxu0 %v1677
    %2951 = vmatmul.bf16.gmra.mxu0 %v507
    %v2952 = vpop.f32.mrf.mxu0
    %v2953 = vadd.f32 %v479, %v2952
    %v2954 = vpop.f32.mrf.mxu0
    %v2955 = vadd.f32 %v479, %v2954
    %2956 = vdwg.mxu0
    %2957 = vmatpush.bf16.msra.mxu0 %v1797
    %2958 = vmatpush.bf16.msra.mxu0 %v1789
    %2959 = vmatpush.bf16.msra.mxu0 %v1781
    %2960 = vmatpush.bf16.msra.mxu0 %v1773
    %2961 = vmatpush.bf16.msra.mxu0 %v1765
    %2962 = vmatpush.bf16.msra.mxu0 %v1757
    %2963 = vmatpush.bf16.msra.mxu0 %v1749
    %2964 = vmatpush.bf16.msra.mxu0 %v1741
    %2965 = vmatmul.bf16.gmra.mxu0 %v508
    %v2966 = vpop.f32.mrf.mxu0
    %v2967 = vadd.f32 %v2953, %v2966
    %v2968 = vpop.f32.mrf.mxu0
    %v2969 = vadd.f32 %v2955, %v2968
    %2970 = vdwg.mxu0
    %2971 = vmatpush.bf16.msra.mxu0 %v1861
    %2972 = vmatpush.bf16.msra.mxu0 %v1853
    %2973 = vmatpush.bf16.msra.mxu0 %v1845
    %2974 = vmatpush.bf16.msra.mxu0 %v1837
    %2975 = vmatpush.bf16.msra.mxu0 %v1829
    %2976 = vmatpush.bf16.msra.mxu0 %v1821
    %2977 = vmatpush.bf16.msra.mxu0 %v1813
    %2978 = vmatpush.bf16.msra.mxu0 %v1805
    %2979 = vmatmul.bf16.gmra.mxu0 %v509
    %v2980 = vpop.f32.mrf.mxu0
    %v2981 = vadd.f32 %v2967, %v2980
    %v2982 = vpop.f32.mrf.mxu0
    %v2983 = vadd.f32 %v2969, %v2982
    %2984 = vdwg.mxu0
    %2985 = vmatpush.bf16.msra.mxu0 %v1925
    %2986 = vmatpush.bf16.msra.mxu0 %v1917
    %2987 = vmatpush.bf16.msra.mxu0 %v1909
    %2988 = vmatpush.bf16.msra.mxu0 %v1901
    %2989 = vmatpush.bf16.msra.mxu0 %v1893
    %2990 = vmatpush.bf16.msra.mxu0 %v1885
    %2991 = vmatpush.bf16.msra.mxu0 %v1877
    %2992 = vmatpush.bf16.msra.mxu0 %v1869
    %2993 = vmatmul.bf16.gmra.mxu0 %v510
    %v2994 = vpop.f32.mrf.mxu0
    %v2995 = vadd.f32 %v2981, %v2994
    %v2996 = vpop.f32.mrf.mxu0
    %v2997 = vadd.f32 %v2983, %v2996
    %2998 = vdwg.mxu0
    %2999 = vmatpush.bf16.msra.mxu0 %v1989
    %3000 = vmatpush.bf16.msra.mxu0 %v1981
    %3001 = vmatpush.bf16.msra.mxu0 %v1973
    %3002 = vmatpush.bf16.msra.mxu0 %v1965
    %3003 = vmatpush.bf16.msra.mxu0 %v1957
    %3004 = vmatpush.bf16.msra.mxu0 %v1949
    %3005 = vmatpush.bf16.msra.mxu0 %v1941
    %3006 = vmatpush.bf16.msra.mxu0 %v1933
    %3007 = vmatmul.bf16.gmra.mxu0 %v511
    %v3008 = vpop.f32.mrf.mxu0
    %v3009 = vadd.f32 %v2995, %v3008
    %v3010 = vpop.f32.mrf.mxu0
    %v3011 = vadd.f32 %v2997, %v3010
    %3012 = vdwg.mxu0
    %3013 = vmatpush.bf16.msra.mxu0 %v2053
    %3014 = vmatpush.bf16.msra.mxu0 %v2045
    %3015 = vmatpush.bf16.msra.mxu0 %v2037
    %3016 = vmatpush.bf16.msra.mxu0 %v2029
    %3017 = vmatpush.bf16.msra.mxu0 %v2021
    %3018 = vmatpush.bf16.msra.mxu0 %v2013
    %3019 = vmatpush.bf16.msra.mxu0 %v2005
    %3020 = vmatpush.bf16.msra.mxu0 %v1997
    %3021 = vmatmul.bf16.gmra.mxu0 %v512
    %v3022 = vpop.f32.mrf.mxu0
    %v3023 = vadd.f32 %v3009, %v3022
    %v3024 = vpop.f32.mrf.mxu0
    %v3025 = vadd.f32 %v3011, %v3024
    %3026 = vdwg.mxu0
    %3027 = vmatpush.bf16.msra.mxu0 %v1734
    %3028 = vmatpush.bf16.msra.mxu0 %v1726
    %3029 = vmatpush.bf16.msra.mxu0 %v1718
    %3030 = vmatpush.bf16.msra.mxu0 %v1710
    %3031 = vmatpush.bf16.msra.mxu0 %v1702
    %3032 = vmatpush.bf16.msra.mxu0 %v1694
    %3033 = vmatpush.bf16.msra.mxu0 %v1686
    %3034 = vmatpush.bf16.msra.mxu0 %v1678
    %3035 = vmatmul.bf16.gmra.mxu0 %v507
    %v3036 = vpop.f32.mrf.mxu0
    %v3037 = vadd.f32 %v480, %v3036
    %v3038 = vpop.f32.mrf.mxu0
    %v3039 = vadd.f32 %v480, %v3038
    %3040 = vdwg.mxu0
    %3041 = vmatpush.bf16.msra.mxu0 %v1798
    %3042 = vmatpush.bf16.msra.mxu0 %v1790
    %3043 = vmatpush.bf16.msra.mxu0 %v1782
    %3044 = vmatpush.bf16.msra.mxu0 %v1774
    %3045 = vmatpush.bf16.msra.mxu0 %v1766
    %3046 = vmatpush.bf16.msra.mxu0 %v1758
    %3047 = vmatpush.bf16.msra.mxu0 %v1750
    %3048 = vmatpush.bf16.msra.mxu0 %v1742
    %3049 = vmatmul.bf16.gmra.mxu0 %v508
    %v3050 = vpop.f32.mrf.mxu0
    %v3051 = vadd.f32 %v3037, %v3050
    %v3052 = vpop.f32.mrf.mxu0
    %v3053 = vadd.f32 %v3039, %v3052
    %3054 = vdwg.mxu0
    %3055 = vmatpush.bf16.msra.mxu0 %v1862
    %3056 = vmatpush.bf16.msra.mxu0 %v1854
    %3057 = vmatpush.bf16.msra.mxu0 %v1846
    %3058 = vmatpush.bf16.msra.mxu0 %v1838
    %3059 = vmatpush.bf16.msra.mxu0 %v1830
    %3060 = vmatpush.bf16.msra.mxu0 %v1822
    %3061 = vmatpush.bf16.msra.mxu0 %v1814
    %3062 = vmatpush.bf16.msra.mxu0 %v1806
    %3063 = vmatmul.bf16.gmra.mxu0 %v509
    %v3064 = vpop.f32.mrf.mxu0
    %v3065 = vadd.f32 %v3051, %v3064
    %v3066 = vpop.f32.mrf.mxu0
    %v3067 = vadd.f32 %v3053, %v3066
    %3068 = vdwg.mxu0
    %3069 = vmatpush.bf16.msra.mxu0 %v1926
    %3070 = vmatpush.bf16.msra.mxu0 %v1918
    %3071 = vmatpush.bf16.msra.mxu0 %v1910
    %3072 = vmatpush.bf16.msra.mxu0 %v1902
    %3073 = vmatpush.bf16.msra.mxu0 %v1894
    %3074 = vmatpush.bf16.msra.mxu0 %v1886
    %3075 = vmatpush.bf16.msra.mxu0 %v1878
    %3076 = vmatpush.bf16.msra.mxu0 %v1870
    %3077 = vmatmul.bf16.gmra.mxu0 %v510
    %v3078 = vpop.f32.mrf.mxu0
    %v3079 = vadd.f32 %v3065, %v3078
    %v3080 = vpop.f32.mrf.mxu0
    %v3081 = vadd.f32 %v3067, %v3080
    %3082 = vdwg.mxu0
    %3083 = vmatpush.bf16.msra.mxu0 %v1990
    %3084 = vmatpush.bf16.msra.mxu0 %v1982
    %3085 = vmatpush.bf16.msra.mxu0 %v1974
    %3086 = vmatpush.bf16.msra.mxu0 %v1966
    %3087 = vmatpush.bf16.msra.mxu0 %v1958
    %3088 = vmatpush.bf16.msra.mxu0 %v1950
    %3089 = vmatpush.bf16.msra.mxu0 %v1942
    %3090 = vmatpush.bf16.msra.mxu0 %v1934
    %3091 = vmatmul.bf16.gmra.mxu0 %v511
    %v3092 = vpop.f32.mrf.mxu0
    %v3093 = vadd.f32 %v3079, %v3092
    %v3094 = vpop.f32.mrf.mxu0
    %v3095 = vadd.f32 %v3081, %v3094
    %3096 = vdwg.mxu0
    %3097 = vmatpush.bf16.msra.mxu0 %v2054
    %3098 = vmatpush.bf16.msra.mxu0 %v2046
    %3099 = vmatpush.bf16.msra.mxu0 %v2038
    %3100 = vmatpush.bf16.msra.mxu0 %v2030
    %3101 = vmatpush.bf16.msra.mxu0 %v2022
    %3102 = vmatpush.bf16.msra.mxu0 %v2014
    %3103 = vmatpush.bf16.msra.mxu0 %v2006
    %3104 = vmatpush.bf16.msra.mxu0 %v1998
    %3105 = vmatmul.bf16.gmra.mxu0 %v512
    %v3106 = vpop.f32.mrf.mxu0
    %v3107 = vadd.f32 %v3093, %v3106
    %v3108 = vpop.f32.mrf.mxu0
    %v3109 = vadd.f32 %v3095, %v3108
    %3110 = vdwg.mxu0
    %v3111 = vxor.u32 %v2519, 2147483648
    %v3112 = vxor.u32 %v2603, 2147483648
    %v3113 = vxor.u32 %v2687, 2147483648
    %v3114 = vxor.u32 %v2771, 2147483648
    %v3115 = vxor.u32 %v2855, 2147483648
    %v3116 = vxor.u32 %v2939, 2147483648
    %v3117 = vxor.u32 %v3023, 2147483648
    %v3118 = vxor.u32 %v3107, 2147483648
    %v3119 = vxor.u32 %v2521, 2147483648
    %v3120 = vxor.u32 %v2605, 2147483648
    %v3121 = vxor.u32 %v2689, 2147483648
    %v3122 = vxor.u32 %v2773, 2147483648
    %v3123 = vxor.u32 %v2857, 2147483648
    %v3124 = vxor.u32 %v2941, 2147483648
    %v3125 = vxor.u32 %v3025, 2147483648
    %v3126 = vxor.u32 %v3109, 2147483648
    %v3127 = vmul.f32 %v3111, 1.442695
    %v3128 = vpow.pop %v3127
    %v3129 = vmul.f32 %v3112, 1.442695
    %v3130 = vpow.pop %v3129
    %v3131 = vmul.f32 %v3113, 1.442695
    %v3132 = vpow.pop %v3131
    %v3133 = vmul.f32 %v3114, 1.442695
    %v3134 = vpow.pop %v3133
    %v3135 = vmul.f32 %v3115, 1.442695
    %v3136 = vpow.pop %v3135
    %v3137 = vmul.f32 %v3116, 1.442695
    %v3138 = vpow.pop %v3137
    %v3139 = vmul.f32 %v3117, 1.442695
    %v3140 = vpow.pop %v3139
    %v3141 = vmul.f32 %v3118, 1.442695
    %v3142 = vpow.pop %v3141
    %v3143 = vmul.f32 %v3119, 1.442695
    %v3144 = vpow.pop %v3143
    %v3145 = vmul.f32 %v3120, 1.442695
    %v3146 = vpow.pop %v3145
    %v3147 = vmul.f32 %v3121, 1.442695
    %v3148 = vpow.pop %v3147
    %v3149 = vmul.f32 %v3122, 1.442695
    %v3150 = vpow.pop %v3149
    %v3151 = vmul.f32 %v3123, 1.442695
    %v3152 = vpow.pop %v3151
    %v3153 = vmul.f32 %v3124, 1.442695
    %v3154 = vpow.pop %v3153
    %v3155 = vmul.f32 %v3125, 1.442695
    %v3156 = vpow.pop %v3155
    %v3157 = vmul.f32 %v3126, 1.442695
    %v3158 = vpow.pop %v3157
    %v3159 = vadd.f32 %v3128, 1.0
    %v3160 = vadd.f32 %v3130, 1.0
    %v3161 = vadd.f32 %v3132, 1.0
    %v3162 = vadd.f32 %v3134, 1.0
    %v3163 = vadd.f32 %v3136, 1.0
    %v3164 = vadd.f32 %v3138, 1.0
    %v3165 = vadd.f32 %v3140, 1.0
    %v3166 = vadd.f32 %v3142, 1.0
    %v3167 = vadd.f32 %v3144, 1.0
    %v3168 = vadd.f32 %v3146, 1.0
    %v3169 = vadd.f32 %v3148, 1.0
    %v3170 = vadd.f32 %v3150, 1.0
    %v3171 = vadd.f32 %v3152, 1.0
    %v3172 = vadd.f32 %v3154, 1.0
    %v3173 = vadd.f32 %v3156, 1.0
    %v3174 = vadd.f32 %v3158, 1.0
    %v3175 = vrcp.pop %v3159
    %v3176 = vmul.f32 %v3159, %v3175
    %v3177 = vsub.f32 1.0, %v3176
    %v3178 = vmul.f32 %v3175, %v3177
    %v3179 = vadd.f32 %v3175, %v3178
    %vm3180 = vweird.f32 %v3159
    %vm3181 = vweird.f32 %v3175
    %vm3182 = vmor %vm3180, %vm3181
    %v3183 = vsel %vm3182, %v3175, %v3179
    %v3184 = vand.u32 2147483647, %v3159
    %vm3185 = vcmp.eq.f32.partialorder %v3184, 8.507059e+37
    %v3186 = vand.u32 %v3159, 2147483648
    %v3187 = vor.u32 1.1754944e-38, %v3186
    %v3188 = vsel %vm3185, %v3187, %v3183
    %v3189 = vmul.f32 1.0, %v3188
    %v3190 = vrcp.pop %v3160
    %v3191 = vmul.f32 %v3160, %v3190
    %v3192 = vsub.f32 1.0, %v3191
    %v3193 = vmul.f32 %v3190, %v3192
    %v3194 = vadd.f32 %v3190, %v3193
    %vm3195 = vweird.f32 %v3160
    %vm3196 = vweird.f32 %v3190
    %vm3197 = vmor %vm3195, %vm3196
    %v3198 = vsel %vm3197, %v3190, %v3194
    %v3199 = vand.u32 2147483647, %v3160
    %vm3200 = vcmp.eq.f32.partialorder %v3199, 8.507059e+37
    %v3201 = vand.u32 %v3160, 2147483648
    %v3202 = vor.u32 1.1754944e-38, %v3201
    %v3203 = vsel %vm3200, %v3202, %v3198
    %v3204 = vmul.f32 1.0, %v3203
    %v3205 = vrcp.pop %v3161
    %v3206 = vmul.f32 %v3161, %v3205
    %v3207 = vsub.f32 1.0, %v3206
    %v3208 = vmul.f32 %v3205, %v3207
    %v3209 = vadd.f32 %v3205, %v3208
    %vm3210 = vweird.f32 %v3161
    %vm3211 = vweird.f32 %v3205
    %vm3212 = vmor %vm3210, %vm3211
    %v3213 = vsel %vm3212, %v3205, %v3209
    %v3214 = vand.u32 2147483647, %v3161
    %vm3215 = vcmp.eq.f32.partialorder %v3214, 8.507059e+37
    %v3216 = vand.u32 %v3161, 2147483648
    %v3217 = vor.u32 1.1754944e-38, %v3216
    %v3218 = vsel %vm3215, %v3217, %v3213
    %v3219 = vmul.f32 1.0, %v3218
    %v3220 = vrcp.pop %v3162
    %v3221 = vmul.f32 %v3162, %v3220
    %v3222 = vsub.f32 1.0, %v3221
    %v3223 = vmul.f32 %v3220, %v3222
    %v3224 = vadd.f32 %v3220, %v3223
    %vm3225 = vweird.f32 %v3162
    %vm3226 = vweird.f32 %v3220
    %vm3227 = vmor %vm3225, %vm3226
    %v3228 = vsel %vm3227, %v3220, %v3224
    %v3229 = vand.u32 2147483647, %v3162
    %vm3230 = vcmp.eq.f32.partialorder %v3229, 8.507059e+37
    %v3231 = vand.u32 %v3162, 2147483648
    %v3232 = vor.u32 1.1754944e-38, %v3231
    %v3233 = vsel %vm3230, %v3232, %v3228
    %v3234 = vmul.f32 1.0, %v3233
    %v3235 = vrcp.pop %v3163
    %v3236 = vmul.f32 %v3163, %v3235
    %v3237 = vsub.f32 1.0, %v3236
    %v3238 = vmul.f32 %v3235, %v3237
    %v3239 = vadd.f32 %v3235, %v3238
    %vm3240 = vweird.f32 %v3163
    %vm3241 = vweird.f32 %v3235
    %vm3242 = vmor %vm3240, %vm3241
    %v3243 = vsel %vm3242, %v3235, %v3239
    %v3244 = vand.u32 2147483647, %v3163
    %vm3245 = vcmp.eq.f32.partialorder %v3244, 8.507059e+37
    %v3246 = vand.u32 %v3163, 2147483648
    %v3247 = vor.u32 1.1754944e-38, %v3246
    %v3248 = vsel %vm3245, %v3247, %v3243
    %v3249 = vmul.f32 1.0, %v3248
    %v3250 = vrcp.pop %v3164
    %v3251 = vmul.f32 %v3164, %v3250
    %v3252 = vsub.f32 1.0, %v3251
    %v3253 = vmul.f32 %v3250, %v3252
    %v3254 = vadd.f32 %v3250, %v3253
    %vm3255 = vweird.f32 %v3164
    %vm3256 = vweird.f32 %v3250
    %vm3257 = vmor %vm3255, %vm3256
    %v3258 = vsel %vm3257, %v3250, %v3254
    %v3259 = vand.u32 2147483647, %v3164
    %vm3260 = vcmp.eq.f32.partialorder %v3259, 8.507059e+37
    %v3261 = vand.u32 %v3164, 2147483648
    %v3262 = vor.u32 1.1754944e-38, %v3261
    %v3263 = vsel %vm3260, %v3262, %v3258
    %v3264 = vmul.f32 1.0, %v3263
    %v3265 = vrcp.pop %v3165
    %v3266 = vmul.f32 %v3165, %v3265
    %v3267 = vsub.f32 1.0, %v3266
    %v3268 = vmul.f32 %v3265, %v3267
    %v3269 = vadd.f32 %v3265, %v3268
    %vm3270 = vweird.f32 %v3165
    %vm3271 = vweird.f32 %v3265
    %vm3272 = vmor %vm3270, %vm3271
    %v3273 = vsel %vm3272, %v3265, %v3269
    %v3274 = vand.u32 2147483647, %v3165
    %vm3275 = vcmp.eq.f32.partialorder %v3274, 8.507059e+37
    %v3276 = vand.u32 %v3165, 2147483648
    %v3277 = vor.u32 1.1754944e-38, %v3276
    %v3278 = vsel %vm3275, %v3277, %v3273
    %v3279 = vmul.f32 1.0, %v3278
    %v3280 = vrcp.pop %v3166
    %v3281 = vmul.f32 %v3166, %v3280
    %v3282 = vsub.f32 1.0, %v3281
    %v3283 = vmul.f32 %v3280, %v3282
    %v3284 = vadd.f32 %v3280, %v3283
    %vm3285 = vweird.f32 %v3166
    %vm3286 = vweird.f32 %v3280
    %vm3287 = vmor %vm3285, %vm3286
    %v3288 = vsel %vm3287, %v3280, %v3284
    %v3289 = vand.u32 2147483647, %v3166
    %vm3290 = vcmp.eq.f32.partialorder %v3289, 8.507059e+37
    %v3291 = vand.u32 %v3166, 2147483648
    %v3292 = vor.u32 1.1754944e-38, %v3291
    %v3293 = vsel %vm3290, %v3292, %v3288
    %v3294 = vmul.f32 1.0, %v3293
    %v3295 = vrcp.pop %v3167
    %v3296 = vmul.f32 %v3167, %v3295
    %v3297 = vsub.f32 1.0, %v3296
    %v3298 = vmul.f32 %v3295, %v3297
    %v3299 = vadd.f32 %v3295, %v3298
    %vm3300 = vweird.f32 %v3167
    %vm3301 = vweird.f32 %v3295
    %vm3302 = vmor %vm3300, %vm3301
    %v3303 = vsel %vm3302, %v3295, %v3299
    %v3304 = vand.u32 2147483647, %v3167
    %vm3305 = vcmp.eq.f32.partialorder %v3304, 8.507059e+37
    %v3306 = vand.u32 %v3167, 2147483648
    %v3307 = vor.u32 1.1754944e-38, %v3306
    %v3308 = vsel %vm3305, %v3307, %v3303
    %v3309 = vmul.f32 1.0, %v3308
    %v3310 = vrcp.pop %v3168
    %v3311 = vmul.f32 %v3168, %v3310
    %v3312 = vsub.f32 1.0, %v3311
    %v3313 = vmul.f32 %v3310, %v3312
    %v3314 = vadd.f32 %v3310, %v3313
    %vm3315 = vweird.f32 %v3168
    %vm3316 = vweird.f32 %v3310
    %vm3317 = vmor %vm3315, %vm3316
    %v3318 = vsel %vm3317, %v3310, %v3314
    %v3319 = vand.u32 2147483647, %v3168
    %vm3320 = vcmp.eq.f32.partialorder %v3319, 8.507059e+37
    %v3321 = vand.u32 %v3168, 2147483648
    %v3322 = vor.u32 1.1754944e-38, %v3321
    %v3323 = vsel %vm3320, %v3322, %v3318
    %v3324 = vmul.f32 1.0, %v3323
    %v3325 = vrcp.pop %v3169
    %v3326 = vmul.f32 %v3169, %v3325
    %v3327 = vsub.f32 1.0, %v3326
    %v3328 = vmul.f32 %v3325, %v3327
    %v3329 = vadd.f32 %v3325, %v3328
    %vm3330 = vweird.f32 %v3169
    %vm3331 = vweird.f32 %v3325
    %vm3332 = vmor %vm3330, %vm3331
    %v3333 = vsel %vm3332, %v3325, %v3329
    %v3334 = vand.u32 2147483647, %v3169
    %vm3335 = vcmp.eq.f32.partialorder %v3334, 8.507059e+37
    %v3336 = vand.u32 %v3169, 2147483648
    %v3337 = vor.u32 1.1754944e-38, %v3336
    %v3338 = vsel %vm3335, %v3337, %v3333
    %v3339 = vmul.f32 1.0, %v3338
    %v3340 = vrcp.pop %v3170
    %v3341 = vmul.f32 %v3170, %v3340
    %v3342 = vsub.f32 1.0, %v3341
    %v3343 = vmul.f32 %v3340, %v3342
    %v3344 = vadd.f32 %v3340, %v3343
    %vm3345 = vweird.f32 %v3170
    %vm3346 = vweird.f32 %v3340
    %vm3347 = vmor %vm3345, %vm3346
    %v3348 = vsel %vm3347, %v3340, %v3344
    %v3349 = vand.u32 2147483647, %v3170
    %vm3350 = vcmp.eq.f32.partialorder %v3349, 8.507059e+37
    %v3351 = vand.u32 %v3170, 2147483648
    %v3352 = vor.u32 1.1754944e-38, %v3351
    %v3353 = vsel %vm3350, %v3352, %v3348
    %v3354 = vmul.f32 1.0, %v3353
    %v3355 = vrcp.pop %v3171
    %v3356 = vmul.f32 %v3171, %v3355
    %v3357 = vsub.f32 1.0, %v3356
    %v3358 = vmul.f32 %v3355, %v3357
    %v3359 = vadd.f32 %v3355, %v3358
    %vm3360 = vweird.f32 %v3171
    %vm3361 = vweird.f32 %v3355
    %vm3362 = vmor %vm3360, %vm3361
    %v3363 = vsel %vm3362, %v3355, %v3359
    %v3364 = vand.u32 2147483647, %v3171
    %vm3365 = vcmp.eq.f32.partialorder %v3364, 8.507059e+37
    %v3366 = vand.u32 %v3171, 2147483648
    %v3367 = vor.u32 1.1754944e-38, %v3366
    %v3368 = vsel %vm3365, %v3367, %v3363
    %v3369 = vmul.f32 1.0, %v3368
    %v3370 = vrcp.pop %v3172
    %v3371 = vmul.f32 %v3172, %v3370
    %v3372 = vsub.f32 1.0, %v3371
    %v3373 = vmul.f32 %v3370, %v3372
    %v3374 = vadd.f32 %v3370, %v3373
    %vm3375 = vweird.f32 %v3172
    %vm3376 = vweird.f32 %v3370
    %vm3377 = vmor %vm3375, %vm3376
    %v3378 = vsel %vm3377, %v3370, %v3374
    %v3379 = vand.u32 2147483647, %v3172
    %vm3380 = vcmp.eq.f32.partialorder %v3379, 8.507059e+37
    %v3381 = vand.u32 %v3172, 2147483648
    %v3382 = vor.u32 1.1754944e-38, %v3381
    %v3383 = vsel %vm3380, %v3382, %v3378
    %v3384 = vmul.f32 1.0, %v3383
    %v3385 = vrcp.pop %v3173
    %v3386 = vmul.f32 %v3173, %v3385
    %v3387 = vsub.f32 1.0, %v3386
    %v3388 = vmul.f32 %v3385, %v3387
    %v3389 = vadd.f32 %v3385, %v3388
    %vm3390 = vweird.f32 %v3173
    %vm3391 = vweird.f32 %v3385
    %vm3392 = vmor %vm3390, %vm3391
    %v3393 = vsel %vm3392, %v3385, %v3389
    %v3394 = vand.u32 2147483647, %v3173
    %vm3395 = vcmp.eq.f32.partialorder %v3394, 8.507059e+37
    %v3396 = vand.u32 %v3173, 2147483648
    %v3397 = vor.u32 1.1754944e-38, %v3396
    %v3398 = vsel %vm3395, %v3397, %v3393
    %v3399 = vmul.f32 1.0, %v3398
    %v3400 = vrcp.pop %v3174
    %v3401 = vmul.f32 %v3174, %v3400
    %v3402 = vsub.f32 1.0, %v3401
    %v3403 = vmul.f32 %v3400, %v3402
    %v3404 = vadd.f32 %v3400, %v3403
    %vm3405 = vweird.f32 %v3174
    %vm3406 = vweird.f32 %v3400
    %vm3407 = vmor %vm3405, %vm3406
    %v3408 = vsel %vm3407, %v3400, %v3404
    %v3409 = vand.u32 2147483647, %v3174
    %vm3410 = vcmp.eq.f32.partialorder %v3409, 8.507059e+37
    %v3411 = vand.u32 %v3174, 2147483648
    %v3412 = vor.u32 1.1754944e-38, %v3411
    %v3413 = vsel %vm3410, %v3412, %v3408
    %v3414 = vmul.f32 1.0, %v3413
    %v3415 = vld [vmem:[#allocation8] sm:$0xff]
    %v3417 = vperm.slane %v3415, 0
    %v3418 = vperm.slane %v3415, 1
    %v3419 = vperm.slane %v3415, 2
    %v3420 = vperm.slane %v3415, 3
    %v3421 = vperm.slane %v3415, 4
    %v3422 = vperm.slane %v3415, 5
    %v3423 = vperm.slane %v3415, 6
    %v3424 = vperm.slane %v3415, 7
    %v3433 = vmul.f32 %v3189, %v3417
    %v3434 = vmul.f32 %v3204, %v3418
    %v3435 = vmul.f32 %v3219, %v3419
    %v3436 = vmul.f32 %v3234, %v3420
    %v3437 = vmul.f32 %v3249, %v3421
    %v3438 = vmul.f32 %v3264, %v3422
    %v3439 = vmul.f32 %v3279, %v3423
    %v3440 = vmul.f32 %v3294, %v3424
    %v3441 = vmul.f32 %v3309, %v3417
    %v3442 = vmul.f32 %v3324, %v3418
    %v3443 = vmul.f32 %v3339, %v3419
    %v3444 = vmul.f32 %v3354, %v3420
    %v3445 = vmul.f32 %v3369, %v3421
    %v3446 = vmul.f32 %v3384, %v3422
    %v3447 = vmul.f32 %v3399, %v3423
    %v3448 = vmul.f32 %v3414, %v3424
    %v3449 = vadd.f32 %v3433, %v3434
    %v3450 = vadd.f32 %v3449, %v3435
    %v3451 = vadd.f32 %v3450, %v3436
    %v3452 = vadd.f32 %v3451, %v3437
    %v3453 = vadd.f32 %v3452, %v3438
    %v3454 = vadd.f32 %v3453, %v3439
    %v3455 = vadd.f32 %v3454, %v3440
    %3456 = vadd.xlane.f32.xlu0 %v3455
    %v3457 = vpop.xlane.xlu0 %3456
    %v3458 = vadd.f32 %v3441, %v3442
    %v3459 = vadd.f32 %v3458, %v3443
    %v3460 = vadd.f32 %v3459, %v3444
    %v3461 = vadd.f32 %v3460, %v3445
    %v3462 = vadd.f32 %v3461, %v3446
    %v3463 = vadd.f32 %v3462, %v3447
    %v3464 = vadd.f32 %v3463, %v3448
    %3465 = vadd.xlane.f32.xlu0 %v3464
    %v3466 = vpop.xlane.xlu0 %3465
    %v3467 = vld [vmem:[#allocation2] sm:$0x1]
    %v3469 = vperm.slane %v3467, 0
    %v3471 = vadd.f32 %v3457, %v3469
    %v3472 = vadd.f32 %v3466, %v3469
    %vm3473 = vcmask 7168
    %3474 = vst.msk [vmem:[%s5] sm:$0xff] %vm3473, %v3471
    %3475 = vst.msk [vmem:[%s5 + $0x8] sm:$0xff] %vm3473, %v3472
    // Predicated region
    $region38: #{tpu_custom_call.1} parent=1 // pred_check
      _
    $region39: #{tpu_custom_call.1} parent=1 // pred_check_branch
      %3477 = sbr.rel (0) target = $region41
    $region40: #{tpu_custom_call.1} parent=1 // pred_region
      _
    $region41: #{tpu_custom_call.1} parent=1 // pred_fallthru
      _
    // Predicated region
    $region42: #{tpu_custom_call.1} parent=1 // pred_check
      _
    $region43: #{tpu_custom_call.1} parent=1 // pred_check_branch
      %3479 = sbr.rel (0) target = $region45
    $region44: #{tpu_custom_call.1} parent=1 // pred_region
      _
    $region45: #{tpu_custom_call.1} parent=1 // pred_fallthru
      _
    %3480 = vsyncpa [#allocation4], 1
    %3481 = vsyncpa [#allocation6], 1
    %3482 = vsyncpa [#allocation9], 1

</llo_original>
